<compile_context>
chip_gen: v7x
topology: tpu7x:2x2x1
jax: 0.10.0
libtpu: 0.0.40
codegen_flags: <defaults>
</compile_context>

<pallas_src>
import jax
import jax.numpy as jnp
from jax.experimental import pallas as pl
from jax.experimental.pallas import tpu as pltpu

CPAD = 128  # lane-dense padded output width for every GEMM


def _round_up(x, m):
    return ((x + m - 1) // m) * m


# ----------------------------------------------------------------------------
# Pallas kernels
# ----------------------------------------------------------------------------
def _conv_gemm_bias_relu_pool_kernel(p_ref, w_ref, b_ref, o_ref):
    """Fused conv-as-GEMM + bias + ReLU + 2x2 maxpool.

    p_ref: (4, TM, K)  im2col patches, one slab per 2x2-pool quadrant
    w_ref: (K, CPAD)   conv weights (zero-padded columns)
    b_ref: (1, CPAD)   bias (zero-padded)
    o_ref: (TM, CPAD)  pooled, ReLU'd output rows (one row per pooled pixel)
    """
    w = w_ref[...]
    b = b_ref[...]

    def quadrant(q):
        acc = jnp.dot(p_ref[q], w, preferred_element_type=jnp.float32)
        return jnp.maximum(acc + b, 0.0)

    pooled = jnp.maximum(jnp.maximum(quadrant(0), quadrant(1)),
                         jnp.maximum(quadrant(2), quadrant(3)))
    o_ref[...] = pooled.astype(o_ref.dtype)


def _fc_stack_kernel(x_ref, w1_ref, b1_ref, w2_ref, b2_ref, w3_ref, b3_ref, o_ref):
    """Fused fc1+ReLU -> fc2+ReLU -> fc3, all weights resident in VMEM."""
    h = jnp.dot(x_ref[...], w1_ref[...], preferred_element_type=jnp.float32)
    h = jnp.maximum(h + b1_ref[...], 0.0)
    h = jnp.dot(h, w2_ref[...], preferred_element_type=jnp.float32)
    h = jnp.maximum(h + b2_ref[...], 0.0)
    o = jnp.dot(h, w3_ref[...], preferred_element_type=jnp.float32) + b3_ref[...]
    o_ref[...] = o.astype(o_ref.dtype)


# ----------------------------------------------------------------------------
# Wrappers (glue: patch extraction, padding, pallas_call plumbing)
# ----------------------------------------------------------------------------
def _im2col_pooled(x_nhwc, k):
    """im2col with rows grouped by 2x2-pool quadrant.

    Returns (4, N*Hp*Wp, k*k*C): quads[qy*2+qx, n*Hp*Wp + h'*Wp + w', (kh*k+kw)*C + c]
      = x[n, 2h'+qy+kh, 2w'+qx+kw, c]
    """
    N, H, W, C = x_nhwc.shape
    Ho, Wo = H - k + 1, W - k + 1
    Hp, Wp = Ho // 2, Wo // 2
    quads = []
    for qy in range(2):
        for qx in range(2):
            taps = []
            for kh in range(k):
                for kw in range(k):
                    t = x_nhwc[:, qy + kh: qy + kh + 2 * Hp: 2,
                               qx + kw: qx + kw + 2 * Wp: 2, :]       # (N,Hp,Wp,C)
                    taps.append(t)
            q = jnp.stack(taps, axis=-2).reshape(N * Hp * Wp, k * k * C)
            quads.append(q)
    return jnp.stack(quads, axis=0), (N, Hp, Wp)


def conv_block(x_nhwc, w_mat, b_row, k, cout):
    """relu(conv_valid(x, w) + b) followed by 2x2/stride-2 maxpool, one pallas_call."""
    patches, (N, Hp, Wp) = _im2col_pooled(x_nhwc, k)        # (4, Mq, K)
    Mq = N * Hp * Wp
    Kdim = patches.shape[-1]

    TM = min(512, _round_up(Mq, 8))                         # v7x-safe VMEM tile
    Mpad = _round_up(Mq, TM)
    if Mpad != Mq:
        patches = jnp.pad(patches, ((0, 0), (0, Mpad - Mq), (0, 0)))

    out = pl.pallas_call(
        _conv_gemm_bias_relu_pool_kernel,
        out_shape=jax.ShapeDtypeStruct((Mpad, CPAD), x_nhwc.dtype),
        grid=(Mpad // TM,),
        in_specs=[
            pl.BlockSpec((4, TM, Kdim), lambda i: (0, i, 0)),
            pl.BlockSpec((Kdim, CPAD), lambda i: (0, 0)),
            pl.BlockSpec((1, CPAD), lambda i: (0, 0)),
        ],
        out_specs=pl.BlockSpec((TM, CPAD), lambda i: (i, 0)),
        compiler_params=pltpu.CompilerParams(dimension_semantics=("parallel",)),
    )(patches, w_mat, b_row)

    return out[:Mq, :cout].reshape(N, Hp, Wp, cout)


def fc_stack(x, w1, b1, w2, b2, w3, b3):
    """Fused fc1->fc2->fc3 (ReLU between), lane-dense padded to CPAD columns."""
    N, K = x.shape
    TB = min(512, _round_up(N, 8))
    Npad = _round_up(N, TB)
    if Npad != N:
        x = jnp.pad(x, ((0, Npad - N), (0, 0)))

    out = pl.pallas_call(
        _fc_stack_kernel,
        out_shape=jax.ShapeDtypeStruct((Npad, CPAD), x.dtype),
        grid=(Npad // TB,),
        in_specs=[
            pl.BlockSpec((TB, K), lambda i: (i, 0)),
            pl.BlockSpec(w1.shape, lambda i: (0, 0)),
            pl.BlockSpec((1, CPAD), lambda i: (0, 0)),
            pl.BlockSpec(w2.shape, lambda i: (0, 0)),
            pl.BlockSpec((1, CPAD), lambda i: (0, 0)),
            pl.BlockSpec(w3.shape, lambda i: (0, 0)),
            pl.BlockSpec((1, CPAD), lambda i: (0, 0)),
        ],
        out_specs=pl.BlockSpec((TB, CPAD), lambda i: (i, 0)),
        compiler_params=pltpu.CompilerParams(dimension_semantics=("parallel",)),
    )(x, w1, b1, w2, b2, w3, b3)
    return out[:N]


# ----------------------------------------------------------------------------
# Deterministic parameter init (PyTorch-style uniform) + one-time kernel layout
# ----------------------------------------------------------------------------
def _uniform(key, shape, fan_in):
    bound = 1.0 / jnp.sqrt(jnp.asarray(fan_in, jnp.float32))
    return jax.random.uniform(key, shape, jnp.float32, -bound, bound)


def init_params(key):
    ks = jax.random.split(key, 10)
    p = {}
    p["conv1_w"] = _uniform(ks[0], (6, 1, 5, 5), 1 * 5 * 5)
    p["conv1_b"] = _uniform(ks[1], (6,), 1 * 5 * 5)
    p["conv2_w"] = _uniform(ks[2], (16, 6, 5, 5), 6 * 5 * 5)
    p["conv2_b"] = _uniform(ks[3], (16,), 6 * 5 * 5)
    p["fc1_w"] = _uniform(ks[4], (120, 256), 256)   # torch Linear: (out, in)
    p["fc1_b"] = _uniform(ks[5], (120,), 256)
    p["fc2_w"] = _uniform(ks[6], (84, 120), 120)
    p["fc2_b"] = _uniform(ks[7], (84,), 120)
    p["fc3_w"] = _uniform(ks[8], (10, 84), 84)
    p["fc3_b"] = _uniform(ks[9], (10,), 84)
    return p


def prepare_kernel_params(p):
    """Fold all per-forward layout work into init: transpose, permute, zero-pad to CPAD."""
    def pad_cols(m):
        return jnp.pad(m, ((0, 0), (0, CPAD - m.shape[1])))

    def pad_rows_cols(m):
        return jnp.pad(m, ((0, CPAD - m.shape[0]), (0, CPAD - m.shape[1])))

    def pad_bias(v):
        return jnp.pad(v, (0, CPAD - v.shape[0])).reshape(1, CPAD)

    kp = {}
    for name, k, cin, cout in (("conv1", 5, 1, 6), ("conv2", 5, 6, 16)):
        w = p[f"{name}_w"]                                     # (Cout,Cin,KH,KW)
        wm = jnp.transpose(w, (2, 3, 1, 0)).reshape(k * k * cin, cout)
        kp[f"{name}_w"] = pad_cols(wm)                         # (K, 128)
        kp[f"{name}_b"] = pad_bias(p[f"{name}_b"])             # (1, 128)

    # fc1: reorder input features from torch's NCHW flatten (c*16+h*4+w)
    # to the NHWC flatten (h*64+w*16+c) produced by the conv path, then (in,out)+pad.
    w1 = p["fc1_w"].reshape(120, 16, 4, 4)                     # (o, c, h, w)
    w1 = jnp.transpose(w1, (2, 3, 1, 0)).reshape(256, 120)     # row = h*64 + w*16 + c
    kp["fc1_w"] = pad_cols(w1)                                 # (256, 128)
    kp["fc1_b"] = pad_bias(p["fc1_b"])
    kp["fc2_w"] = pad_rows_cols(p["fc2_w"].T)                  # (128, 128)
    kp["fc2_b"] = pad_bias(p["fc2_b"])
    kp["fc3_w"] = pad_rows_cols(p["fc3_w"].T)                  # (128, 128)
    kp["fc3_b"] = pad_bias(p["fc3_b"])
    return kp


# ----------------------------------------------------------------------------
# Full forward pass (mirrors SimpleCNN.forward = forward_1 + forward_2)
# ----------------------------------------------------------------------------
def simple_cnn_forward(x_nchw, kp):
    x = jnp.transpose(x_nchw, (0, 2, 3, 1))                    # (N,28,28,1) NHWC
    x = conv_block(x, kp["conv1_w"], kp["conv1_b"], 5, 6)      # (N,12,12,6)
    x = conv_block(x, kp["conv2_w"], kp["conv2_b"], 5, 16)     # (N,4,4,16)
    x = x.reshape(x.shape[0], -1)                              # NHWC flatten (N,256); fc1 pre-permuted
    logits = fc_stack(x, kp["fc1_w"], kp["fc1_b"],
                      kp["fc2_w"], kp["fc2_b"],
                      kp["fc3_w"], kp["fc3_b"])                # (N,128)
    return logits[:, :10]


if __name__ == "__main__":
    key = jax.random.PRNGKey(0)
    k_x, k_p = jax.random.split(key)
    # Input must be 1x28x28 so that flatten yields 256 (= 16*4*4), as fc1 expects.
    x = jax.random.normal(k_x, (2, 1, 28, 28), dtype=jnp.float32)
    params = init_params(k_p)
    kparams = prepare_kernel_params(params)

    fwd = jax.jit(simple_cnn_forward)
    out = jax.block_until_ready(fwd(x, kparams))

    assert out.shape == (2, 10), out.shape
    assert out.dtype == jnp.float32
    assert bool(jnp.all(jnp.isfinite(out)))
    print("KERNEL_OK")
</pallas_src>

<mosaic_0001>
module attributes {stable_mosaic.version = 11 : i64} {
  func.func @_conv_gemm_bias_relu_pool_kernel(%arg0: i32, %arg1: memref<4x288x25xf32, #tpu.memory_space<vmem>>, %arg2: memref<25x128xf32, #tpu.memory_space<vmem>>, %arg3: memref<1x128xf32, #tpu.memory_space<vmem>>, %arg4: memref<288x128xf32, #tpu.memory_space<vmem>>) attributes {dimension_semantics = [#tpu.dimension_semantics<parallel>], iteration_bounds = array<i64: 1>, scalar_prefetch = 0 : i64, scratch_operands = 0 : i64, tpu.core_type = #tpu.core_type<tc>, window_params = [{transform_indices = @transform_0, window_bounds = array<i64: 4, 288, 25>}, {pipeline_mode = #tpu.pipeline_mode<synchronous>, transform_indices = @transform_1, window_bounds = array<i64: 25, 128>}, {pipeline_mode = #tpu.pipeline_mode<synchronous>, transform_indices = @transform_2, window_bounds = array<i64: 1, 128>}, {transform_indices = @transform_3, window_bounds = array<i64: 288, 128>}]} {
    %c0 = arith.constant 0 : index
    %c0_0 = arith.constant 0 : index
    %0 = vector.load %arg2[%c0, %c0_0] : memref<25x128xf32, #tpu.memory_space<vmem>>, vector<25x128xf32>
    %c0_1 = arith.constant 0 : index
    %c0_2 = arith.constant 0 : index
    %1 = vector.load %arg3[%c0_1, %c0_2] : memref<1x128xf32, #tpu.memory_space<vmem>>, vector<1x128xf32>
    %c0_3 = arith.constant 0 : index
    %c0_4 = arith.constant 0 : index
    %c0_5 = arith.constant 0 : index
    %2 = vector.load %arg1[%c0_3, %c0_4, %c0_5] : memref<4x288x25xf32, #tpu.memory_space<vmem>>, vector<1x288x25xf32>
    %3 = vector.shape_cast %2 : vector<1x288x25xf32> to vector<288x25xf32>
    %cst = arith.constant dense<0.000000e+00> : vector<288x128xf32>
    %4 = tpu.matmul %3, %0, %cst {dimension_numbers = #tpu.dot_dimension_numbers<[1], [0], [0], [1], [0, 0, 1, 1], [], []>} : vector<288x25xf32>, vector<25x128xf32>, vector<288x128xf32> -> vector<288x128xf32>
    %5 = vector.broadcast %1 : vector<1x128xf32> to vector<288x128xf32>
    %6 = arith.addf %4, %5 : vector<288x128xf32>
    %cst_6 = arith.constant 0.000000e+00 : f32
    %7 = vector.broadcast %cst_6 : f32 to vector<288x128xf32>
    %8 = arith.maximumf %6, %7 : vector<288x128xf32>
    %c1 = arith.constant 1 : index
    %c0_7 = arith.constant 0 : index
    %c0_8 = arith.constant 0 : index
    %9 = vector.load %arg1[%c1, %c0_7, %c0_8] : memref<4x288x25xf32, #tpu.memory_space<vmem>>, vector<1x288x25xf32>
    %10 = vector.shape_cast %9 : vector<1x288x25xf32> to vector<288x25xf32>
    %cst_9 = arith.constant dense<0.000000e+00> : vector<288x128xf32>
    %11 = tpu.matmul %10, %0, %cst_9 {dimension_numbers = #tpu.dot_dimension_numbers<[1], [0], [0], [1], [0, 0, 1, 1], [], []>} : vector<288x25xf32>, vector<25x128xf32>, vector<288x128xf32> -> vector<288x128xf32>
    %12 = vector.broadcast %1 : vector<1x128xf32> to vector<288x128xf32>
    %13 = arith.addf %11, %12 : vector<288x128xf32>
    %cst_10 = arith.constant 0.000000e+00 : f32
    %14 = vector.broadcast %cst_10 : f32 to vector<288x128xf32>
    %15 = arith.maximumf %13, %14 : vector<288x128xf32>
    %16 = arith.maximumf %8, %15 : vector<288x128xf32>
    %c2 = arith.constant 2 : index
    %c0_11 = arith.constant 0 : index
    %c0_12 = arith.constant 0 : index
    %17 = vector.load %arg1[%c2, %c0_11, %c0_12] : memref<4x288x25xf32, #tpu.memory_space<vmem>>, vector<1x288x25xf32>
    %18 = vector.shape_cast %17 : vector<1x288x25xf32> to vector<288x25xf32>
    %cst_13 = arith.constant dense<0.000000e+00> : vector<288x128xf32>
    %19 = tpu.matmul %18, %0, %cst_13 {dimension_numbers = #tpu.dot_dimension_numbers<[1], [0], [0], [1], [0, 0, 1, 1], [], []>} : vector<288x25xf32>, vector<25x128xf32>, vector<288x128xf32> -> vector<288x128xf32>
    %20 = vector.broadcast %1 : vector<1x128xf32> to vector<288x128xf32>
    %21 = arith.addf %19, %20 : vector<288x128xf32>
    %cst_14 = arith.constant 0.000000e+00 : f32
    %22 = vector.broadcast %cst_14 : f32 to vector<288x128xf32>
    %23 = arith.maximumf %21, %22 : vector<288x128xf32>
    %c3 = arith.constant 3 : index
    %c0_15 = arith.constant 0 : index
    %c0_16 = arith.constant 0 : index
    %24 = vector.load %arg1[%c3, %c0_15, %c0_16] : memref<4x288x25xf32, #tpu.memory_space<vmem>>, vector<1x288x25xf32>
    %25 = vector.shape_cast %24 : vector<1x288x25xf32> to vector<288x25xf32>
    %cst_17 = arith.constant dense<0.000000e+00> : vector<288x128xf32>
    %26 = tpu.matmul %25, %0, %cst_17 {dimension_numbers = #tpu.dot_dimension_numbers<[1], [0], [0], [1], [0, 0, 1, 1], [], []>} : vector<288x25xf32>, vector<25x128xf32>, vector<288x128xf32> -> vector<288x128xf32>
    %27 = vector.broadcast %1 : vector<1x128xf32> to vector<288x128xf32>
    %28 = arith.addf %26, %27 : vector<288x128xf32>
    %cst_18 = arith.constant 0.000000e+00 : f32
    %29 = vector.broadcast %cst_18 : f32 to vector<288x128xf32>
    %30 = arith.maximumf %28, %29 : vector<288x128xf32>
    %31 = arith.maximumf %23, %30 : vector<288x128xf32>
    %32 = arith.maximumf %16, %31 : vector<288x128xf32>
    %c0_19 = arith.constant 0 : index
    %c0_20 = arith.constant 0 : index
    %33 = vector.load %arg4[%c0_19, %c0_20] : memref<288x128xf32, #tpu.memory_space<vmem>>, vector<288x128xf32>
    tpu.vector_store %arg4[%c0_19, %c0_20], %32 {strides = array<i32>} : memref<288x128xf32, #tpu.memory_space<vmem>>, vector<288x128xf32>,
    return
  }
  func.func @transform_0(%arg0: i32) -> (i32, i32, i32) {
    %c0_i32 = arith.constant 0 : i32
    %c0_i32_0 = arith.constant 0 : i32
    %c0_i32_1 = arith.constant 0 : i32
    return %c0_i32, %arg0, %c0_i32_0 : i32, i32, i32
  }
  func.func @transform_1(%arg0: i32) -> (i32, i32) {
    %c0_i32 = arith.constant 0 : i32
    %c0_i32_0 = arith.constant 0 : i32
    %c0_i32_1 = arith.constant 0 : i32
    return %c0_i32, %c0_i32_0 : i32, i32
  }
  func.func @transform_2(%arg0: i32) -> (i32, i32) {
    %c0_i32 = arith.constant 0 : i32
    %c0_i32_0 = arith.constant 0 : i32
    %c0_i32_1 = arith.constant 0 : i32
    return %c0_i32, %c0_i32_0 : i32, i32
  }
  func.func @transform_3(%arg0: i32) -> (i32, i32) {
    %c0_i32 = arith.constant 0 : i32
    %c0_i32_0 = arith.constant 0 : i32
    return %arg0, %c0_i32 : i32, i32
  }
}

module attributes {stable_mosaic.version = 11 : i64} {
  func.func @_conv_gemm_bias_relu_pool_kernel(%arg0: i32, %arg1: memref<4x32x150xf32, #tpu.memory_space<vmem>>, %arg2: memref<150x128xf32, #tpu.memory_space<vmem>>, %arg3: memref<1x128xf32, #tpu.memory_space<vmem>>, %arg4: memref<32x128xf32, #tpu.memory_space<vmem>>) attributes {dimension_semantics = [#tpu.dimension_semantics<parallel>], iteration_bounds = array<i64: 1>, scalar_prefetch = 0 : i64, scratch_operands = 0 : i64, tpu.core_type = #tpu.core_type<tc>, window_params = [{transform_indices = @transform_0, window_bounds = array<i64: 4, 32, 150>}, {pipeline_mode = #tpu.pipeline_mode<synchronous>, transform_indices = @transform_1, window_bounds = array<i64: 150, 128>}, {pipeline_mode = #tpu.pipeline_mode<synchronous>, transform_indices = @transform_2, window_bounds = array<i64: 1, 128>}, {transform_indices = @transform_3, window_bounds = array<i64: 32, 128>}]} {
    %c0 = arith.constant 0 : index
    %c0_0 = arith.constant 0 : index
    %0 = vector.load %arg2[%c0, %c0_0] : memref<150x128xf32, #tpu.memory_space<vmem>>, vector<150x128xf32>
    %c0_1 = arith.constant 0 : index
    %c0_2 = arith.constant 0 : index
    %1 = vector.load %arg3[%c0_1, %c0_2] : memref<1x128xf32, #tpu.memory_space<vmem>>, vector<1x128xf32>
    %c0_3 = arith.constant 0 : index
    %c0_4 = arith.constant 0 : index
    %c0_5 = arith.constant 0 : index
    %2 = vector.load %arg1[%c0_3, %c0_4, %c0_5] : memref<4x32x150xf32, #tpu.memory_space<vmem>>, vector<1x32x150xf32>
    %3 = vector.shape_cast %2 : vector<1x32x150xf32> to vector<32x150xf32>
    %cst = arith.constant dense<0.000000e+00> : vector<32x128xf32>
    %4 = tpu.matmul %3, %0, %cst {dimension_numbers = #tpu.dot_dimension_numbers<[1], [0], [0], [1], [0, 0, 1, 1], [], []>} : vector<32x150xf32>, vector<150x128xf32>, vector<32x128xf32> -> vector<32x128xf32>
    %5 = vector.broadcast %1 : vector<1x128xf32> to vector<32x128xf32>
    %6 = arith.addf %4, %5 : vector<32x128xf32>
    %cst_6 = arith.constant 0.000000e+00 : f32
    %7 = vector.broadcast %cst_6 : f32 to vector<32x128xf32>
    %8 = arith.maximumf %6, %7 : vector<32x128xf32>
    %c1 = arith.constant 1 : index
    %c0_7 = arith.constant 0 : index
    %c0_8 = arith.constant 0 : index
    %9 = vector.load %arg1[%c1, %c0_7, %c0_8] : memref<4x32x150xf32, #tpu.memory_space<vmem>>, vector<1x32x150xf32>
    %10 = vector.shape_cast %9 : vector<1x32x150xf32> to vector<32x150xf32>
    %cst_9 = arith.constant dense<0.000000e+00> : vector<32x128xf32>
    %11 = tpu.matmul %10, %0, %cst_9 {dimension_numbers = #tpu.dot_dimension_numbers<[1], [0], [0], [1], [0, 0, 1, 1], [], []>} : vector<32x150xf32>, vector<150x128xf32>, vector<32x128xf32> -> vector<32x128xf32>
    %12 = vector.broadcast %1 : vector<1x128xf32> to vector<32x128xf32>
    %13 = arith.addf %11, %12 : vector<32x128xf32>
    %cst_10 = arith.constant 0.000000e+00 : f32
    %14 = vector.broadcast %cst_10 : f32 to vector<32x128xf32>
    %15 = arith.maximumf %13, %14 : vector<32x128xf32>
    %16 = arith.maximumf %8, %15 : vector<32x128xf32>
    %c2 = arith.constant 2 : index
    %c0_11 = arith.constant 0 : index
    %c0_12 = arith.constant 0 : index
    %17 = vector.load %arg1[%c2, %c0_11, %c0_12] : memref<4x32x150xf32, #tpu.memory_space<vmem>>, vector<1x32x150xf32>
    %18 = vector.shape_cast %17 : vector<1x32x150xf32> to vector<32x150xf32>
    %cst_13 = arith.constant dense<0.000000e+00> : vector<32x128xf32>
    %19 = tpu.matmul %18, %0, %cst_13 {dimension_numbers = #tpu.dot_dimension_numbers<[1], [0], [0], [1], [0, 0, 1, 1], [], []>} : vector<32x150xf32>, vector<150x128xf32>, vector<32x128xf32> -> vector<32x128xf32>
    %20 = vector.broadcast %1 : vector<1x128xf32> to vector<32x128xf32>
    %21 = arith.addf %19, %20 : vector<32x128xf32>
    %cst_14 = arith.constant 0.000000e+00 : f32
    %22 = vector.broadcast %cst_14 : f32 to vector<32x128xf32>
    %23 = arith.maximumf %21, %22 : vector<32x128xf32>
    %c3 = arith.constant 3 : index
    %c0_15 = arith.constant 0 : index
    %c0_16 = arith.constant 0 : index
    %24 = vector.load %arg1[%c3, %c0_15, %c0_16] : memref<4x32x150xf32, #tpu.memory_space<vmem>>, vector<1x32x150xf32>
    %25 = vector.shape_cast %24 : vector<1x32x150xf32> to vector<32x150xf32>
    %cst_17 = arith.constant dense<0.000000e+00> : vector<32x128xf32>
    %26 = tpu.matmul %25, %0, %cst_17 {dimension_numbers = #tpu.dot_dimension_numbers<[1], [0], [0], [1], [0, 0, 1, 1], [], []>} : vector<32x150xf32>, vector<150x128xf32>, vector<32x128xf32> -> vector<32x128xf32>
    %27 = vector.broadcast %1 : vector<1x128xf32> to vector<32x128xf32>
    %28 = arith.addf %26, %27 : vector<32x128xf32>
    %cst_18 = arith.constant 0.000000e+00 : f32
    %29 = vector.broadcast %cst_18 : f32 to vector<32x128xf32>
    %30 = arith.maximumf %28, %29 : vector<32x128xf32>
    %31 = arith.maximumf %23, %30 : vector<32x128xf32>
    %32 = arith.maximumf %16, %31 : vector<32x128xf32>
    %c0_19 = arith.constant 0 : index
    %c0_20 = arith.constant 0 : index
    %33 = vector.load %arg4[%c0_19, %c0_20] : memref<32x128xf32, #tpu.memory_space<vmem>>, vector<32x128xf32>
    tpu.vector_store %arg4[%c0_19, %c0_20], %32 {strides = array<i32>} : memref<32x128xf32, #tpu.memory_space<vmem>>, vector<32x128xf32>,
    return
  }
  func.func @transform_0(%arg0: i32) -> (i32, i32, i32) {
    %c0_i32 = arith.constant 0 : i32
    %c0_i32_0 = arith.constant 0 : i32
    %c0_i32_1 = arith.constant 0 : i32
    return %c0_i32, %arg0, %c0_i32_0 : i32, i32, i32
  }
  func.func @transform_1(%arg0: i32) -> (i32, i32) {
    %c0_i32 = arith.constant 0 : i32
    %c0_i32_0 = arith.constant 0 : i32
    %c0_i32_1 = arith.constant 0 : i32
    return %c0_i32, %c0_i32_0 : i32, i32
  }
  func.func @transform_2(%arg0: i32) -> (i32, i32) {
    %c0_i32 = arith.constant 0 : i32
    %c0_i32_0 = arith.constant 0 : i32
    %c0_i32_1 = arith.constant 0 : i32
    return %c0_i32, %c0_i32_0 : i32, i32
  }
  func.func @transform_3(%arg0: i32) -> (i32, i32) {
    %c0_i32 = arith.constant 0 : i32
    %c0_i32_0 = arith.constant 0 : i32
    return %arg0, %c0_i32 : i32, i32
  }
}

module attributes {stable_mosaic.version = 11 : i64} {
  func.func @_fc_stack_kernel(%arg0: i32, %arg1: memref<8x256xf32, #tpu.memory_space<vmem>>, %arg2: memref<256x128xf32, #tpu.memory_space<vmem>>, %arg3: memref<1x128xf32, #tpu.memory_space<vmem>>, %arg4: memref<128x128xf32, #tpu.memory_space<vmem>>, %arg5: memref<1x128xf32, #tpu.memory_space<vmem>>, %arg6: memref<128x128xf32, #tpu.memory_space<vmem>>, %arg7: memref<1x128xf32, #tpu.memory_space<vmem>>, %arg8: memref<8x128xf32, #tpu.memory_space<vmem>>) attributes {dimension_semantics = [#tpu.dimension_semantics<parallel>], iteration_bounds = array<i64: 1>, scalar_prefetch = 0 : i64, scratch_operands = 0 : i64, tpu.core_type = #tpu.core_type<tc>, window_params = [{transform_indices = @transform_0, window_bounds = array<i64: 8, 256>}, {pipeline_mode = #tpu.pipeline_mode<synchronous>, transform_indices = @transform_1, window_bounds = array<i64: 256, 128>}, {pipeline_mode = #tpu.pipeline_mode<synchronous>, transform_indices = @transform_2, window_bounds = array<i64: 1, 128>}, {pipeline_mode = #tpu.pipeline_mode<synchronous>, transform_indices = @transform_3, window_bounds = array<i64: 128, 128>}, {pipeline_mode = #tpu.pipeline_mode<synchronous>, transform_indices = @transform_4, window_bounds = array<i64: 1, 128>}, {pipeline_mode = #tpu.pipeline_mode<synchronous>, transform_indices = @transform_5, window_bounds = array<i64: 128, 128>}, {pipeline_mode = #tpu.pipeline_mode<synchronous>, transform_indices = @transform_6, window_bounds = array<i64: 1, 128>}, {transform_indices = @transform_7, window_bounds = array<i64: 8, 128>}]} {
    %c0 = arith.constant 0 : index
    %c0_0 = arith.constant 0 : index
    %0 = vector.load %arg1[%c0, %c0_0] : memref<8x256xf32, #tpu.memory_space<vmem>>, vector<8x256xf32>
    %c0_1 = arith.constant 0 : index
    %c0_2 = arith.constant 0 : index
    %1 = vector.load %arg2[%c0_1, %c0_2] : memref<256x128xf32, #tpu.memory_space<vmem>>, vector<256x128xf32>
    %cst = arith.constant dense<0.000000e+00> : vector<8x128xf32>
    %2 = tpu.matmul %0, %1, %cst {dimension_numbers = #tpu.dot_dimension_numbers<[1], [0], [0], [1], [0, 0, 1, 1], [], []>} : vector<8x256xf32>, vector<256x128xf32>, vector<8x128xf32> -> vector<8x128xf32>
    %c0_3 = arith.constant 0 : index
    %c0_4 = arith.constant 0 : index
    %3 = vector.load %arg3[%c0_3, %c0_4] : memref<1x128xf32, #tpu.memory_space<vmem>>, vector<1x128xf32>
    %4 = vector.broadcast %3 : vector<1x128xf32> to vector<8x128xf32>
    %5 = arith.addf %2, %4 : vector<8x128xf32>
    %cst_5 = arith.constant 0.000000e+00 : f32
    %6 = vector.broadcast %cst_5 : f32 to vector<8x128xf32>
    %7 = arith.maximumf %5, %6 : vector<8x128xf32>
    %c0_6 = arith.constant 0 : index
    %c0_7 = arith.constant 0 : index
    %8 = vector.load %arg4[%c0_6, %c0_7] : memref<128x128xf32, #tpu.memory_space<vmem>>, vector<128x128xf32>
    %cst_8 = arith.constant dense<0.000000e+00> : vector<8x128xf32>
    %9 = tpu.matmul %7, %8, %cst_8 {dimension_numbers = #tpu.dot_dimension_numbers<[1], [0], [0], [1], [0, 0, 1, 1], [], []>} : vector<8x128xf32>, vector<128x128xf32>, vector<8x128xf32> -> vector<8x128xf32>
    %c0_9 = arith.constant 0 : index
    %c0_10 = arith.constant 0 : index
    %10 = vector.load %arg5[%c0_9, %c0_10] : memref<1x128xf32, #tpu.memory_space<vmem>>, vector<1x128xf32>
    %11 = vector.broadcast %10 : vector<1x128xf32> to vector<8x128xf32>
    %12 = arith.addf %9, %11 : vector<8x128xf32>
    %cst_11 = arith.constant 0.000000e+00 : f32
    %13 = vector.broadcast %cst_11 : f32 to vector<8x128xf32>
    %14 = arith.maximumf %12, %13 : vector<8x128xf32>
    %c0_12 = arith.constant 0 : index
    %c0_13 = arith.constant 0 : index
    %15 = vector.load %arg6[%c0_12, %c0_13] : memref<128x128xf32, #tpu.memory_space<vmem>>, vector<128x128xf32>
    %cst_14 = arith.constant dense<0.000000e+00> : vector<8x128xf32>
    %16 = tpu.matmul %14, %15, %cst_14 {dimension_numbers = #tpu.dot_dimension_numbers<[1], [0], [0], [1], [0, 0, 1, 1], [], []>} : vector<8x128xf32>, vector<128x128xf32>, vector<8x128xf32> -> vector<8x128xf32>
    %c0_15 = arith.constant 0 : index
    %c0_16 = arith.constant 0 : index
    %17 = vector.load %arg7[%c0_15, %c0_16] : memref<1x128xf32, #tpu.memory_space<vmem>>, vector<1x128xf32>
    %18 = vector.broadcast %17 : vector<1x128xf32> to vector<8x128xf32>
    %19 = arith.addf %16, %18 : vector<8x128xf32>
    %c0_17 = arith.constant 0 : index
    %c0_18 = arith.constant 0 : index
    %20 = vector.load %arg8[%c0_17, %c0_18] : memref<8x128xf32, #tpu.memory_space<vmem>>, vector<8x128xf32>
    tpu.vector_store %arg8[%c0_17, %c0_18], %19 {strides = array<i32>} : memref<8x128xf32, #tpu.memory_space<vmem>>, vector<8x128xf32>,
    return
  }
  func.func @transform_0(%arg0: i32) -> (i32, i32) {
    %c0_i32 = arith.constant 0 : i32
    %c0_i32_0 = arith.constant 0 : i32
    return %arg0, %c0_i32 : i32, i32
  }
  func.func @transform_1(%arg0: i32) -> (i32, i32) {
    %c0_i32 = arith.constant 0 : i32
    %c0_i32_0 = arith.constant 0 : i32
    %c0_i32_1 = arith.constant 0 : i32
    return %c0_i32, %c0_i32_0 : i32, i32
  }
  func.func @transform_2(%arg0: i32) -> (i32, i32) {
    %c0_i32 = arith.constant 0 : i32
    %c0_i32_0 = arith.constant 0 : i32
    %c0_i32_1 = arith.constant 0 : i32
    return %c0_i32, %c0_i32_0 : i32, i32
  }
  func.func @transform_3(%arg0: i32) -> (i32, i32) {
    %c0_i32 = arith.constant 0 : i32
    %c0_i32_0 = arith.constant 0 : i32
    %c0_i32_1 = arith.constant 0 : i32
    return %c0_i32, %c0_i32_0 : i32, i32
  }
  func.func @transform_4(%arg0: i32) -> (i32, i32) {
    %c0_i32 = arith.constant 0 : i32
    %c0_i32_0 = arith.constant 0 : i32
    %c0_i32_1 = arith.constant 0 : i32
    return %c0_i32, %c0_i32_0 : i32, i32
  }
  func.func @transform_5(%arg0: i32) -> (i32, i32) {
    %c0_i32 = arith.constant 0 : i32
    %c0_i32_0 = arith.constant 0 : i32
    %c0_i32_1 = arith.constant 0 : i32
    return %c0_i32, %c0_i32_0 : i32, i32
  }
  func.func @transform_6(%arg0: i32) -> (i32, i32) {
    %c0_i32 = arith.constant 0 : i32
    %c0_i32_0 = arith.constant 0 : i32
    %c0_i32_1 = arith.constant 0 : i32
    return %c0_i32, %c0_i32_0 : i32, i32
  }
  func.func @transform_7(%arg0: i32) -> (i32, i32) {
    %c0_i32 = arith.constant 0 : i32
    %c0_i32_0 = arith.constant 0 : i32
    return %arg0, %c0_i32 : i32, i32
  }
}

</mosaic_0001>

<llo_original>
// kernel: simple_cnn_forward.3
$region0: #{simple_cnn_forward.3}
  #allocation0 [shape = 'u32[]', space=smem, size = 0x4, offset = 0x4, fixed_abs, tag = 'smem constant byte address 0x4 - core index']
  #allocation1 [shape = 'u32[144,128]{1,0:T(1,128)}', space=vmem, size = 0x12000, scoped, tag = 'internal scratch']
  %s0 = inlined_call_operand.vmem [shape: f32[4,288,25], index: 0, kind: input, shape index: {}]
  %s1 = inlined_call_operand.vmem [shape: f32[25,128], index: 1, kind: input, shape index: {}]
  %s2 = inlined_call_operand.vmem [shape: f32[1,128], index: 2, kind: input, shape index: {}]
  %s3 = inlined_call_operand.vmem [shape: f32[288,128], index: 3, kind: output, shape index: {}]
  %s4 = sld [smem:[#allocation0]]
  $region22: #{simple_cnn_forward.3} parent=0
    _
  %s6 = ssub.s32 1, %s4
  %s7 = scalar_select 0, %s6, %s4
  // Predicated region
  $region2: #{simple_cnn_forward.3} parent=0 // pred_check
    _
  $region3: #{simple_cnn_forward.3} parent=0 // pred_check_branch
    %9 = sbr.rel (0) target = $region5
  $region4: #{simple_cnn_forward.3} parent=0 // pred_region
    _
  $region5: #{simple_cnn_forward.3} parent=0 // pred_fallthru
    _
  // Predicated region
  $region6: #{simple_cnn_forward.3} parent=0 // pred_check
    _
  $region7: #{simple_cnn_forward.3} parent=0 // pred_check_branch
    %11 = sbr.rel (0) target = $region9
  $region8: #{simple_cnn_forward.3} parent=0 // pred_region
    _
  $region9: #{simple_cnn_forward.3} parent=0 // pred_fallthru
    _
  // Predicated region
  $region10: #{simple_cnn_forward.3} parent=0 // pred_check
    _
  $region11: #{simple_cnn_forward.3} parent=0 // pred_check_branch
    %13 = sbr.rel (0) target = $region13
  $region12: #{simple_cnn_forward.3} parent=0 // pred_region
    _
  $region13: #{simple_cnn_forward.3} parent=0 // pred_fallthru
    _
  %v14 = vld [vmem:[%s1] sm:$0xff]
  %v15 = vld [vmem:[%s1 + $0x8] sm:$0xff]
  %v16 = vld [vmem:[%s1 + $0x10] sm:$0xff]
  %v17 = vld [vmem:[%s1 + $0x18] sm:$0x1]
  %v18 = vld [vmem:[%s2] sm:$0x1]
  %v19 = vld [vmem:[%s0] sm:$0xff]
  %v20 = vld [vmem:[%s0 + $0x8] sm:$0xff]
  %v21 = vld [vmem:[%s0 + $0x10] sm:$0xff]
  %v22 = vld [vmem:[%s0 + $0x18] sm:$0xff]
  %v23 = vld [vmem:[%s0 + $0x20] sm:$0xff]
  %v24 = vld [vmem:[%s0 + $0x28] sm:$0xff]
  %v25 = vld [vmem:[%s0 + $0x30] sm:$0xff]
  %v26 = vld [vmem:[%s0 + $0x38] sm:$0xff]
  %v27 = vld [vmem:[%s0 + $0x40] sm:$0xff]
  %v28 = vld [vmem:[%s0 + $0x48] sm:$0xff]
  %v29 = vld [vmem:[%s0 + $0x50] sm:$0xff]
  %v30 = vld [vmem:[%s0 + $0x58] sm:$0xff]
  %v31 = vld [vmem:[%s0 + $0x60] sm:$0xff]
  %v32 = vld [vmem:[%s0 + $0x68] sm:$0xff]
  %v33 = vld [vmem:[%s0 + $0x70] sm:$0xff]
  %v34 = vld [vmem:[%s0 + $0x78] sm:$0xff]
  %v35 = vld [vmem:[%s0 + $0x80] sm:$0xff]
  %v36 = vld [vmem:[%s0 + $0x88] sm:$0xff]
  %v37 = vld [vmem:[%s0 + $0x90] sm:$0xff]
  %v38 = vld [vmem:[%s0 + $0x98] sm:$0xff]
  %v39 = vld [vmem:[%s0 + $0xa0] sm:$0xff]
  %v40 = vld [vmem:[%s0 + $0xa8] sm:$0xff]
  %v41 = vld [vmem:[%s0 + $0xb0] sm:$0xff]
  %v42 = vld [vmem:[%s0 + $0xb8] sm:$0xff]
  %v43 = vld [vmem:[%s0 + $0xc0] sm:$0xff]
  %v44 = vld [vmem:[%s0 + $0xc8] sm:$0xff]
  %v45 = vld [vmem:[%s0 + $0xd0] sm:$0xff]
  %v46 = vld [vmem:[%s0 + $0xd8] sm:$0xff]
  %v47 = vld [vmem:[%s0 + $0xe0] sm:$0xff]
  %v48 = vld [vmem:[%s0 + $0xe8] sm:$0xff]
  %v49 = vld [vmem:[%s0 + $0xf0] sm:$0xff]
  %v50 = vld [vmem:[%s0 + $0xf8] sm:$0xff]
  %v51 = vld [vmem:[%s0 + $0x100] sm:$0xff]
  %v52 = vld [vmem:[%s0 + $0x108] sm:$0xff]
  %v53 = vld [vmem:[%s0 + $0x110] sm:$0xff]
  %v54 = vld [vmem:[%s0 + $0x118] sm:$0xff]
  %v56 = vlaneseq
  %v57 = vshrl.u32 %v56, 7
  %v58 = vsub.s32 0, %v57
  %v59 = vrot.slane %v18, %v58
  %vm61 = vcmask 203776
  %v63 = vsel %vm61, %v19, 0
  %v66 = vsel %vm61, %v20, 0
  %v69 = vsel %vm61, %v21, 0
  %v72 = vsel %vm61, %v22, 0
  %v75 = vsel %vm61, %v23, 0
  %v78 = vsel %vm61, %v24, 0
  %v81 = vsel %vm61, %v25, 0
  %v84 = vsel %vm61, %v26, 0
  %v87 = vsel %vm61, %v27, 0
  %v90 = vsel %vm61, %v28, 0
  %v93 = vsel %vm61, %v29, 0
  %v96 = vsel %vm61, %v30, 0
  %v99 = vsel %vm61, %v31, 0
  %v102 = vsel %vm61, %v32, 0
  %v105 = vsel %vm61, %v33, 0
  %v108 = vsel %vm61, %v34, 0
  %v111 = vsel %vm61, %v35, 0
  %v114 = vsel %vm61, %v36, 0
  %v117 = vsel %vm61, %v37, 0
  %v120 = vsel %vm61, %v38, 0
  %v123 = vsel %vm61, %v39, 0
  %v126 = vsel %vm61, %v40, 0
  %v129 = vsel %vm61, %v41, 0
  %v132 = vsel %vm61, %v42, 0
  %v135 = vsel %vm61, %v43, 0
  %v138 = vsel %vm61, %v44, 0
  %v141 = vsel %vm61, %v45, 0
  %v144 = vsel %vm61, %v46, 0
  %v147 = vsel %vm61, %v47, 0
  %v150 = vsel %vm61, %v48, 0
  %v153 = vsel %vm61, %v49, 0
  %v156 = vsel %vm61, %v50, 0
  %v159 = vsel %vm61, %v51, 0
  %v162 = vsel %vm61, %v52, 0
  %v165 = vsel %vm61, %v53, 0
  %v168 = vsel %vm61, %v54, 0
  %vm170 = vcmask 1040384
  %v172 = vsel %vm170, %v17, 0
  %174 = vmatprep.subr.mxu0 0.0
  %175 = vmatpush1.msra.mxu0 %v14
  %176 = vmatprep.subr.mxu0 0.0
  %177 = vmatpush1.msra.mxu0 %v15
  %178 = vmatprep.subr.mxu0 0.0
  %179 = vmatpush1.msra.mxu0 %v16
  %180 = vmatprep.subr.mxu0 0.0
  %181 = vmatpush1.msra.mxu0 %v172
  %182 = vmatprep.subr.mxu0 0.0
  %183 = vmatpush1.msra.mxu0 0.0
  %184 = vmatprep.subr.mxu0 0.0
  %185 = vmatpush1.msra.mxu0 0.0
  %186 = vmatprep.subr.mxu0 0.0
  %187 = vmatpush1.msra.mxu0 0.0
  %188 = vmatprep.subr.mxu0 0.0
  %189 = vmatpush1.msra.mxu0 0.0
  %190 = vmatprep.subr.mxu0 0.0
  %191 = vmatpush1.msra.mxu0 0.0
  %192 = vmatprep.subr.mxu0 0.0
  %193 = vmatpush1.msra.mxu0 0.0
  %194 = vmatprep.subr.mxu0 0.0
  %195 = vmatpush1.msra.mxu0 0.0
  %196 = vmatprep.subr.mxu0 0.0
  %197 = vmatpush1.msra.mxu0 0.0
  %198 = vmatprep.subr.mxu0 0.0
  %199 = vmatpush1.msra.mxu0 0.0
  %200 = vmatprep.subr.mxu0 0.0
  %201 = vmatpush1.msra.mxu0 0.0
  %202 = vmatprep.subr.mxu0 0.0
  %203 = vmatpush1.msra.mxu0 0.0
  %204 = vmatprep.subr.mxu0 0.0
  %205 = vmatpush1.msra.mxu0 0.0
  %206 = vmatprep.subr.mxu0 0.0
  %207 = vmatpush1.msra.mxu0 0.0
  %208 = vmatprep.subr.mxu0 0.0
  %209 = vmatpush1.msra.mxu0 0.0
  %210 = vmatprep.subr.mxu0 0.0
  %211 = vmatpush1.msra.mxu0 0.0
  %212 = vmatprep.subr.mxu0 0.0
  %213 = vmatpush1.msra.mxu0 0.0
  %214 = vmatprep.subr.mxu0 0.0
  %215 = vmatpush1.msra.mxu0 0.0
  %216 = vmatprep.subr.mxu0 0.0
  %217 = vmatpush1.msra.mxu0 0.0
  %218 = vmatprep.subr.mxu0 0.0
  %219 = vmatpush1.msra.mxu0 0.0
  %220 = vmatprep.subr.mxu0 0.0
  %221 = vmatpush1.msra.mxu0 0.0
  %222 = vmatprep.subr.mxu0 0.0
  %223 = vmatpush1.msra.mxu0 0.0
  %224 = vmatprep.subr.mxu0 0.0
  %225 = vmatpush1.msra.mxu0 0.0
  %226 = vmatprep.subr.mxu0 0.0
  %227 = vmatpush1.msra.mxu0 0.0
  %228 = vmatprep.subr.mxu0 0.0
  %229 = vmatpush1.msra.mxu0 0.0
  %230 = vmatprep.subr.mxu0 0.0
  %231 = vmatpush1.msra.mxu0 0.0
  %232 = vmatprep.subr.mxu0 0.0
  %233 = vmatpush1.msra.mxu0 0.0
  %234 = vmatprep.subr.mxu0 0.0
  %235 = vmatpush1.msra.mxu0 0.0
  %236 = vmatprep.subr.mxu0 0.0
  %237 = vmatpush1.msra.mxu0 0.0
  %238 = vmatprep.mubr.f32.mxu0 0.0
  %239 = vmatmul.mubr.f32.gmra.mrb[0].mxu0 %v63
  %v240 = vpop.f32.mrb[0].mxu0
  %v241 = vadd.f32 %v59, %v240
  %v242 = vpop.f32.mrb[0].mxu0
  %243 = vmatprep.mubr.f32.mxu0 0.0
  %244 = vmatmul.mubr.f32.gmra.mrb[0].mxu0 %v66
  %v245 = vpop.f32.mrb[0].mxu0
  %v246 = vadd.f32 %v59, %v245
  %v247 = vpop.f32.mrb[0].mxu0
  %248 = vmatprep.mubr.f32.mxu0 0.0
  %249 = vmatmul.mubr.f32.gmra.mrb[0].mxu0 %v69
  %v250 = vpop.f32.mrb[0].mxu0
  %v251 = vadd.f32 %v59, %v250
  %v252 = vpop.f32.mrb[0].mxu0
  %253 = vmatprep.mubr.f32.mxu0 0.0
  %254 = vmatmul.mubr.f32.gmra.mrb[0].mxu0 %v72
  %v255 = vpop.f32.mrb[0].mxu0
  %v256 = vadd.f32 %v59, %v255
  %v257 = vpop.f32.mrb[0].mxu0
  %258 = vmatprep.mubr.f32.mxu0 0.0
  %259 = vmatmul.mubr.f32.gmra.mrb[0].mxu0 %v75
  %v260 = vpop.f32.mrb[0].mxu0
  %v261 = vadd.f32 %v59, %v260
  %v262 = vpop.f32.mrb[0].mxu0
  %263 = vmatprep.mubr.f32.mxu0 0.0
  %264 = vmatmul.mubr.f32.gmra.mrb[0].mxu0 %v78
  %v265 = vpop.f32.mrb[0].mxu0
  %v266 = vadd.f32 %v59, %v265
  %v267 = vpop.f32.mrb[0].mxu0
  %268 = vmatprep.mubr.f32.mxu0 0.0
  %269 = vmatmul.mubr.f32.gmra.mrb[0].mxu0 %v81
  %v270 = vpop.f32.mrb[0].mxu0
  %v271 = vadd.f32 %v59, %v270
  %v272 = vpop.f32.mrb[0].mxu0
  %273 = vmatprep.mubr.f32.mxu0 0.0
  %274 = vmatmul.mubr.f32.gmra.mrb[0].mxu0 %v84
  %v275 = vpop.f32.mrb[0].mxu0
  %v276 = vadd.f32 %v59, %v275
  %v277 = vpop.f32.mrb[0].mxu0
  %278 = vmatprep.mubr.f32.mxu0 0.0
  %279 = vmatmul.mubr.f32.gmra.mrb[0].mxu0 %v87
  %v280 = vpop.f32.mrb[0].mxu0
  %v281 = vadd.f32 %v59, %v280
  %v282 = vpop.f32.mrb[0].mxu0
  %283 = vmatprep.mubr.f32.mxu0 0.0
  %284 = vmatmul.mubr.f32.gmra.mrb[0].mxu0 %v90
  %v285 = vpop.f32.mrb[0].mxu0
  %v286 = vadd.f32 %v59, %v285
  %v287 = vpop.f32.mrb[0].mxu0
  %288 = vmatprep.mubr.f32.mxu0 0.0
  %289 = vmatmul.mubr.f32.gmra.mrb[0].mxu0 %v93
  %v290 = vpop.f32.mrb[0].mxu0
  %v291 = vadd.f32 %v59, %v290
  %v292 = vpop.f32.mrb[0].mxu0
  %293 = vmatprep.mubr.f32.mxu0 0.0
  %294 = vmatmul.mubr.f32.gmra.mrb[0].mxu0 %v96
  %v295 = vpop.f32.mrb[0].mxu0
  %v296 = vadd.f32 %v59, %v295
  %v297 = vpop.f32.mrb[0].mxu0
  %298 = vmatprep.mubr.f32.mxu0 0.0
  %299 = vmatmul.mubr.f32.gmra.mrb[0].mxu0 %v99
  %v300 = vpop.f32.mrb[0].mxu0
  %v301 = vadd.f32 %v59, %v300
  %v302 = vpop.f32.mrb[0].mxu0
  %303 = vmatprep.mubr.f32.mxu0 0.0
  %304 = vmatmul.mubr.f32.gmra.mrb[0].mxu0 %v102
  %v305 = vpop.f32.mrb[0].mxu0
  %v306 = vadd.f32 %v59, %v305
  %v307 = vpop.f32.mrb[0].mxu0
  %308 = vmatprep.mubr.f32.mxu0 0.0
  %309 = vmatmul.mubr.f32.gmra.mrb[0].mxu0 %v105
  %v310 = vpop.f32.mrb[0].mxu0
  %v311 = vadd.f32 %v59, %v310
  %v312 = vpop.f32.mrb[0].mxu0
  %313 = vmatprep.mubr.f32.mxu0 0.0
  %314 = vmatmul.mubr.f32.gmra.mrb[0].mxu0 %v108
  %v315 = vpop.f32.mrb[0].mxu0
  %v316 = vadd.f32 %v59, %v315
  %v317 = vpop.f32.mrb[0].mxu0
  %318 = vmatprep.mubr.f32.mxu0 0.0
  %319 = vmatmul.mubr.f32.gmra.mrb[0].mxu0 %v111
  %v320 = vpop.f32.mrb[0].mxu0
  %v321 = vadd.f32 %v59, %v320
  %v322 = vpop.f32.mrb[0].mxu0
  %323 = vmatprep.mubr.f32.mxu0 0.0
  %324 = vmatmul.mubr.f32.gmra.mrb[0].mxu0 %v114
  %v325 = vpop.f32.mrb[0].mxu0
  %v326 = vadd.f32 %v59, %v325
  %v327 = vpop.f32.mrb[0].mxu0
  %328 = vmatprep.mubr.f32.mxu0 0.0
  %329 = vmatmul.mubr.f32.gmra.mrb[0].mxu0 %v117
  %v330 = vpop.f32.mrb[0].mxu0
  %v331 = vadd.f32 %v59, %v330
  %v332 = vpop.f32.mrb[0].mxu0
  %333 = vmatprep.mubr.f32.mxu0 0.0
  %334 = vmatmul.mubr.f32.gmra.mrb[0].mxu0 %v120
  %v335 = vpop.f32.mrb[0].mxu0
  %v336 = vadd.f32 %v59, %v335
  %v337 = vpop.f32.mrb[0].mxu0
  %338 = vmatprep.mubr.f32.mxu0 0.0
  %339 = vmatmul.mubr.f32.gmra.mrb[0].mxu0 %v123
  %v340 = vpop.f32.mrb[0].mxu0
  %v341 = vadd.f32 %v59, %v340
  %v342 = vpop.f32.mrb[0].mxu0
  %343 = vmatprep.mubr.f32.mxu0 0.0
  %344 = vmatmul.mubr.f32.gmra.mrb[0].mxu0 %v126
  %v345 = vpop.f32.mrb[0].mxu0
  %v346 = vadd.f32 %v59, %v345
  %v347 = vpop.f32.mrb[0].mxu0
  %348 = vmatprep.mubr.f32.mxu0 0.0
  %349 = vmatmul.mubr.f32.gmra.mrb[0].mxu0 %v129
  %v350 = vpop.f32.mrb[0].mxu0
  %v351 = vadd.f32 %v59, %v350
  %v352 = vpop.f32.mrb[0].mxu0
  %353 = vmatprep.mubr.f32.mxu0 0.0
  %354 = vmatmul.mubr.f32.gmra.mrb[0].mxu0 %v132
  %v355 = vpop.f32.mrb[0].mxu0
  %v356 = vadd.f32 %v59, %v355
  %v357 = vpop.f32.mrb[0].mxu0
  %358 = vmatprep.mubr.f32.mxu0 0.0
  %359 = vmatmul.mubr.f32.gmra.mrb[0].mxu0 %v135
  %v360 = vpop.f32.mrb[0].mxu0
  %v361 = vadd.f32 %v59, %v360
  %v362 = vpop.f32.mrb[0].mxu0
  %363 = vmatprep.mubr.f32.mxu0 0.0
  %364 = vmatmul.mubr.f32.gmra.mrb[0].mxu0 %v138
  %v365 = vpop.f32.mrb[0].mxu0
  %v366 = vadd.f32 %v59, %v365
  %v367 = vpop.f32.mrb[0].mxu0
  %368 = vmatprep.mubr.f32.mxu0 0.0
  %369 = vmatmul.mubr.f32.gmra.mrb[0].mxu0 %v141
  %v370 = vpop.f32.mrb[0].mxu0
  %v371 = vadd.f32 %v59, %v370
  %v372 = vpop.f32.mrb[0].mxu0
  %373 = vmatprep.mubr.f32.mxu0 0.0
  %374 = vmatmul.mubr.f32.gmra.mrb[0].mxu0 %v144
  %v375 = vpop.f32.mrb[0].mxu0
  %v376 = vadd.f32 %v59, %v375
  %v377 = vpop.f32.mrb[0].mxu0
  %378 = vmatprep.mubr.f32.mxu0 0.0
  %379 = vmatmul.mubr.f32.gmra.mrb[0].mxu0 %v147
  %v380 = vpop.f32.mrb[0].mxu0
  %v381 = vadd.f32 %v59, %v380
  %v382 = vpop.f32.mrb[0].mxu0
  %383 = vmatprep.mubr.f32.mxu0 0.0
  %384 = vmatmul.mubr.f32.gmra.mrb[0].mxu0 %v150
  %v385 = vpop.f32.mrb[0].mxu0
  %v386 = vadd.f32 %v59, %v385
  %v387 = vpop.f32.mrb[0].mxu0
  %388 = vmatprep.mubr.f32.mxu0 0.0
  %389 = vmatmul.mubr.f32.gmra.mrb[0].mxu0 %v153
  %v390 = vpop.f32.mrb[0].mxu0
  %v391 = vadd.f32 %v59, %v390
  %v392 = vpop.f32.mrb[0].mxu0
  %393 = vmatprep.mubr.f32.mxu0 0.0
  %394 = vmatmul.mubr.f32.gmra.mrb[0].mxu0 %v156
  %v395 = vpop.f32.mrb[0].mxu0
  %v396 = vadd.f32 %v59, %v395
  %v397 = vpop.f32.mrb[0].mxu0
  %398 = vmatprep.mubr.f32.mxu0 0.0
  %399 = vmatmul.mubr.f32.gmra.mrb[0].mxu0 %v159
  %v400 = vpop.f32.mrb[0].mxu0
  %v401 = vadd.f32 %v59, %v400
  %v402 = vpop.f32.mrb[0].mxu0
  %403 = vmatprep.mubr.f32.mxu0 0.0
  %404 = vmatmul.mubr.f32.gmra.mrb[0].mxu0 %v162
  %v405 = vpop.f32.mrb[0].mxu0
  %v406 = vadd.f32 %v59, %v405
  %v407 = vpop.f32.mrb[0].mxu0
  %408 = vmatprep.mubr.f32.mxu0 0.0
  %409 = vmatmul.mubr.f32.gmra.mrb[0].mxu0 %v165
  %v410 = vpop.f32.mrb[0].mxu0
  %v411 = vadd.f32 %v59, %v410
  %v412 = vpop.f32.mrb[0].mxu0
  %413 = vmatprep.mubr.f32.mxu0 0.0
  %414 = vmatmul.mubr.f32.gmra.mrb[0].mxu0 %v168
  %v415 = vpop.f32.mrb[0].mxu0
  %v416 = vadd.f32 %v59, %v415
  %v417 = vpop.f32.mrb[0].mxu0
  %418 = vdwg.mxu0
  %v419 = vmax.f32 %v241, 0.0
  %v420 = vmax.f32 %v246, 0.0
  %v421 = vmax.f32 %v251, 0.0
  %v422 = vmax.f32 %v256, 0.0
  %v423 = vmax.f32 %v261, 0.0
  %v424 = vmax.f32 %v266, 0.0
  %v425 = vmax.f32 %v271, 0.0
  %v426 = vmax.f32 %v276, 0.0
  %v427 = vmax.f32 %v281, 0.0
  %v428 = vmax.f32 %v286, 0.0
  %v429 = vmax.f32 %v291, 0.0
  %v430 = vmax.f32 %v296, 0.0
  %v431 = vmax.f32 %v301, 0.0
  %v432 = vmax.f32 %v306, 0.0
  %v433 = vmax.f32 %v311, 0.0
  %v434 = vmax.f32 %v316, 0.0
  %v435 = vmax.f32 %v321, 0.0
  %v436 = vmax.f32 %v326, 0.0
  %v437 = vmax.f32 %v331, 0.0
  %v438 = vmax.f32 %v336, 0.0
  %v439 = vmax.f32 %v341, 0.0
  %v440 = vmax.f32 %v346, 0.0
  %v441 = vmax.f32 %v351, 0.0
  %v442 = vmax.f32 %v356, 0.0
  %v443 = vmax.f32 %v361, 0.0
  %v444 = vmax.f32 %v366, 0.0
  %v445 = vmax.f32 %v371, 0.0
  %v446 = vmax.f32 %v376, 0.0
  %v447 = vmax.f32 %v381, 0.0
  %v448 = vmax.f32 %v386, 0.0
  %v449 = vmax.f32 %v391, 0.0
  %v450 = vmax.f32 %v396, 0.0
  %v451 = vmax.f32 %v401, 0.0
  %v452 = vmax.f32 %v406, 0.0
  %v453 = vmax.f32 %v411, 0.0
  %v454 = vmax.f32 %v416, 0.0
  %s455 = scalar_lea.vmem %s0, 288
  %v456 = vld [vmem:[%s455] sm:$0xff]
  %v457 = vld [vmem:[%s455 + $0x8] sm:$0xff]
  %v458 = vld [vmem:[%s455 + $0x10] sm:$0xff]
  %v459 = vld [vmem:[%s455 + $0x18] sm:$0xff]
  %v460 = vld [vmem:[%s455 + $0x20] sm:$0xff]
  %v461 = vld [vmem:[%s455 + $0x28] sm:$0xff]
  %v462 = vld [vmem:[%s455 + $0x30] sm:$0xff]
  %v463 = vld [vmem:[%s455 + $0x38] sm:$0xff]
  %v464 = vld [vmem:[%s455 + $0x40] sm:$0xff]
  %v465 = vld [vmem:[%s455 + $0x48] sm:$0xff]
  %v466 = vld [vmem:[%s455 + $0x50] sm:$0xff]
  %v467 = vld [vmem:[%s455 + $0x58] sm:$0xff]
  %v468 = vld [vmem:[%s455 + $0x60] sm:$0xff]
  %v469 = vld [vmem:[%s455 + $0x68] sm:$0xff]
  %v470 = vld [vmem:[%s455 + $0x70] sm:$0xff]
  %v471 = vld [vmem:[%s455 + $0x78] sm:$0xff]
  %v472 = vld [vmem:[%s455 + $0x80] sm:$0xff]
  %v473 = vld [vmem:[%s455 + $0x88] sm:$0xff]
  %v474 = vld [vmem:[%s455 + $0x90] sm:$0xff]
  %v475 = vld [vmem:[%s455 + $0x98] sm:$0xff]
  %v476 = vld [vmem:[%s455 + $0xa0] sm:$0xff]
  %v477 = vld [vmem:[%s455 + $0xa8] sm:$0xff]
  %v478 = vld [vmem:[%s455 + $0xb0] sm:$0xff]
  %v479 = vld [vmem:[%s455 + $0xb8] sm:$0xff]
  %v480 = vld [vmem:[%s455 + $0xc0] sm:$0xff]
  %v481 = vld [vmem:[%s455 + $0xc8] sm:$0xff]
  %v482 = vld [vmem:[%s455 + $0xd0] sm:$0xff]
  %v483 = vld [vmem:[%s455 + $0xd8] sm:$0xff]
  %v484 = vld [vmem:[%s455 + $0xe0] sm:$0xff]
  %v485 = vld [vmem:[%s455 + $0xe8] sm:$0xff]
  %v486 = vld [vmem:[%s455 + $0xf0] sm:$0xff]
  %v487 = vld [vmem:[%s455 + $0xf8] sm:$0xff]
  %v488 = vld [vmem:[%s455 + $0x100] sm:$0xff]
  %v489 = vld [vmem:[%s455 + $0x108] sm:$0xff]
  %v490 = vld [vmem:[%s455 + $0x110] sm:$0xff]
  %v491 = vld [vmem:[%s455 + $0x118] sm:$0xff]
  %v493 = vsel %vm61, %v456, 0
  %v496 = vsel %vm61, %v457, 0
  %v499 = vsel %vm61, %v458, 0
  %v502 = vsel %vm61, %v459, 0
  %v505 = vsel %vm61, %v460, 0
  %v508 = vsel %vm61, %v461, 0
  %v511 = vsel %vm61, %v462, 0
  %v514 = vsel %vm61, %v463, 0
  %v517 = vsel %vm61, %v464, 0
  %v520 = vsel %vm61, %v465, 0
  %v523 = vsel %vm61, %v466, 0
  %v526 = vsel %vm61, %v467, 0
  %v529 = vsel %vm61, %v468, 0
  %v532 = vsel %vm61, %v469, 0
  %v535 = vsel %vm61, %v470, 0
  %v538 = vsel %vm61, %v471, 0
  %v541 = vsel %vm61, %v472, 0
  %v544 = vsel %vm61, %v473, 0
  %v547 = vsel %vm61, %v474, 0
  %v550 = vsel %vm61, %v475, 0
  %v553 = vsel %vm61, %v476, 0
  %v556 = vsel %vm61, %v477, 0
  %v559 = vsel %vm61, %v478, 0
  %v562 = vsel %vm61, %v479, 0
  %v565 = vsel %vm61, %v480, 0
  %v568 = vsel %vm61, %v481, 0
  %v571 = vsel %vm61, %v482, 0
  %v574 = vsel %vm61, %v483, 0
  %v577 = vsel %vm61, %v484, 0
  %v580 = vsel %vm61, %v485, 0
  %v583 = vsel %vm61, %v486, 0
  %v586 = vsel %vm61, %v487, 0
  %v589 = vsel %vm61, %v488, 0
  %v592 = vsel %vm61, %v489, 0
  %v595 = vsel %vm61, %v490, 0
  %v598 = vsel %vm61, %v491, 0
  %600 = vmatprep.subr.mxu0 0.0
  %601 = vmatpush1.msra.mxu0 %v14
  %602 = vmatprep.subr.mxu0 0.0
  %603 = vmatpush1.msra.mxu0 %v15
  %604 = vmatprep.subr.mxu0 0.0
  %605 = vmatpush1.msra.mxu0 %v16
  %606 = vmatprep.subr.mxu0 0.0
  %607 = vmatpush1.msra.mxu0 %v172
  %608 = vmatprep.subr.mxu0 0.0
  %609 = vmatpush1.msra.mxu0 0.0
  %610 = vmatprep.subr.mxu0 0.0
  %611 = vmatpush1.msra.mxu0 0.0
  %612 = vmatprep.subr.mxu0 0.0
  %613 = vmatpush1.msra.mxu0 0.0
  %614 = vmatprep.subr.mxu0 0.0
  %615 = vmatpush1.msra.mxu0 0.0
  %616 = vmatprep.subr.mxu0 0.0
  %617 = vmatpush1.msra.mxu0 0.0
  %618 = vmatprep.subr.mxu0 0.0
  %619 = vmatpush1.msra.mxu0 0.0
  %620 = vmatprep.subr.mxu0 0.0
  %621 = vmatpush1.msra.mxu0 0.0
  %622 = vmatprep.subr.mxu0 0.0
  %623 = vmatpush1.msra.mxu0 0.0
  %624 = vmatprep.subr.mxu0 0.0
  %625 = vmatpush1.msra.mxu0 0.0
  %626 = vmatprep.subr.mxu0 0.0
  %627 = vmatpush1.msra.mxu0 0.0
  %628 = vmatprep.subr.mxu0 0.0
  %629 = vmatpush1.msra.mxu0 0.0
  %630 = vmatprep.subr.mxu0 0.0
  %631 = vmatpush1.msra.mxu0 0.0
  %632 = vmatprep.subr.mxu0 0.0
  %633 = vmatpush1.msra.mxu0 0.0
  %634 = vmatprep.subr.mxu0 0.0
  %635 = vmatpush1.msra.mxu0 0.0
  %636 = vmatprep.subr.mxu0 0.0
  %637 = vmatpush1.msra.mxu0 0.0
  %638 = vmatprep.subr.mxu0 0.0
  %639 = vmatpush1.msra.mxu0 0.0
  %640 = vmatprep.subr.mxu0 0.0
  %641 = vmatpush1.msra.mxu0 0.0
  %642 = vmatprep.subr.mxu0 0.0
  %643 = vmatpush1.msra.mxu0 0.0
  %644 = vmatprep.subr.mxu0 0.0
  %645 = vmatpush1.msra.mxu0 0.0
  %646 = vmatprep.subr.mxu0 0.0
  %647 = vmatpush1.msra.mxu0 0.0
  %648 = vmatprep.subr.mxu0 0.0
  %649 = vmatpush1.msra.mxu0 0.0
  %650 = vmatprep.subr.mxu0 0.0
  %651 = vmatpush1.msra.mxu0 0.0
  %652 = vmatprep.subr.mxu0 0.0
  %653 = vmatpush1.msra.mxu0 0.0
  %654 = vmatprep.subr.mxu0 0.0
  %655 = vmatpush1.msra.mxu0 0.0
  %656 = vmatprep.subr.mxu0 0.0
  %657 = vmatpush1.msra.mxu0 0.0
  %658 = vmatprep.subr.mxu0 0.0
  %659 = vmatpush1.msra.mxu0 0.0
  %660 = vmatprep.subr.mxu0 0.0
  %661 = vmatpush1.msra.mxu0 0.0
  %662 = vmatprep.subr.mxu0 0.0
  %663 = vmatpush1.msra.mxu0 0.0
  %664 = vmatprep.mubr.f32.mxu0 0.0
  %665 = vmatmul.mubr.f32.gmra.mrb[0].mxu0 %v493
  %v666 = vpop.f32.mrb[0].mxu0
  %v667 = vadd.f32 %v59, %v666
  %v668 = vpop.f32.mrb[0].mxu0
  %669 = vmatprep.mubr.f32.mxu0 0.0
  %670 = vmatmul.mubr.f32.gmra.mrb[0].mxu0 %v496
  %v671 = vpop.f32.mrb[0].mxu0
  %v672 = vadd.f32 %v59, %v671
  %v673 = vpop.f32.mrb[0].mxu0
  %674 = vmatprep.mubr.f32.mxu0 0.0
  %675 = vmatmul.mubr.f32.gmra.mrb[0].mxu0 %v499
  %v676 = vpop.f32.mrb[0].mxu0
  %v677 = vadd.f32 %v59, %v676
  %v678 = vpop.f32.mrb[0].mxu0
  %679 = vmatprep.mubr.f32.mxu0 0.0
  %680 = vmatmul.mubr.f32.gmra.mrb[0].mxu0 %v502
  %v681 = vpop.f32.mrb[0].mxu0
  %v682 = vadd.f32 %v59, %v681
  %v683 = vpop.f32.mrb[0].mxu0
  %684 = vmatprep.mubr.f32.mxu0 0.0
  %685 = vmatmul.mubr.f32.gmra.mrb[0].mxu0 %v505
  %v686 = vpop.f32.mrb[0].mxu0
  %v687 = vadd.f32 %v59, %v686
  %v688 = vpop.f32.mrb[0].mxu0
  %689 = vmatprep.mubr.f32.mxu0 0.0
  %690 = vmatmul.mubr.f32.gmra.mrb[0].mxu0 %v508
  %v691 = vpop.f32.mrb[0].mxu0
  %v692 = vadd.f32 %v59, %v691
  %v693 = vpop.f32.mrb[0].mxu0
  %694 = vmatprep.mubr.f32.mxu0 0.0
  %695 = vmatmul.mubr.f32.gmra.mrb[0].mxu0 %v511
  %v696 = vpop.f32.mrb[0].mxu0
  %v697 = vadd.f32 %v59, %v696
  %v698 = vpop.f32.mrb[0].mxu0
  %699 = vmatprep.mubr.f32.mxu0 0.0
  %700 = vmatmul.mubr.f32.gmra.mrb[0].mxu0 %v514
  %v701 = vpop.f32.mrb[0].mxu0
  %v702 = vadd.f32 %v59, %v701
  %v703 = vpop.f32.mrb[0].mxu0
  %704 = vmatprep.mubr.f32.mxu0 0.0
  %705 = vmatmul.mubr.f32.gmra.mrb[0].mxu0 %v517
  %v706 = vpop.f32.mrb[0].mxu0
  %v707 = vadd.f32 %v59, %v706
  %v708 = vpop.f32.mrb[0].mxu0
  %709 = vmatprep.mubr.f32.mxu0 0.0
  %710 = vmatmul.mubr.f32.gmra.mrb[0].mxu0 %v520
  %v711 = vpop.f32.mrb[0].mxu0
  %v712 = vadd.f32 %v59, %v711
  %v713 = vpop.f32.mrb[0].mxu0
  %714 = vmatprep.mubr.f32.mxu0 0.0
  %715 = vmatmul.mubr.f32.gmra.mrb[0].mxu0 %v523
  %v716 = vpop.f32.mrb[0].mxu0
  %v717 = vadd.f32 %v59, %v716
  %v718 = vpop.f32.mrb[0].mxu0
  %719 = vmatprep.mubr.f32.mxu0 0.0
  %720 = vmatmul.mubr.f32.gmra.mrb[0].mxu0 %v526
  %v721 = vpop.f32.mrb[0].mxu0
  %v722 = vadd.f32 %v59, %v721
  %v723 = vpop.f32.mrb[0].mxu0
  %724 = vmatprep.mubr.f32.mxu0 0.0
  %725 = vmatmul.mubr.f32.gmra.mrb[0].mxu0 %v529
  %v726 = vpop.f32.mrb[0].mxu0
  %v727 = vadd.f32 %v59, %v726
  %v728 = vpop.f32.mrb[0].mxu0
  %729 = vmatprep.mubr.f32.mxu0 0.0
  %730 = vmatmul.mubr.f32.gmra.mrb[0].mxu0 %v532
  %v731 = vpop.f32.mrb[0].mxu0
  %v732 = vadd.f32 %v59, %v731
  %v733 = vpop.f32.mrb[0].mxu0
  %734 = vmatprep.mubr.f32.mxu0 0.0
  %735 = vmatmul.mubr.f32.gmra.mrb[0].mxu0 %v535
  %v736 = vpop.f32.mrb[0].mxu0
  %v737 = vadd.f32 %v59, %v736
  %v738 = vpop.f32.mrb[0].mxu0
  %739 = vmatprep.mubr.f32.mxu0 0.0
  %740 = vmatmul.mubr.f32.gmra.mrb[0].mxu0 %v538
  %v741 = vpop.f32.mrb[0].mxu0
  %v742 = vadd.f32 %v59, %v741
  %v743 = vpop.f32.mrb[0].mxu0
  %744 = vmatprep.mubr.f32.mxu0 0.0
  %745 = vmatmul.mubr.f32.gmra.mrb[0].mxu0 %v541
  %v746 = vpop.f32.mrb[0].mxu0
  %v747 = vadd.f32 %v59, %v746
  %v748 = vpop.f32.mrb[0].mxu0
  %749 = vmatprep.mubr.f32.mxu0 0.0
  %750 = vmatmul.mubr.f32.gmra.mrb[0].mxu0 %v544
  %v751 = vpop.f32.mrb[0].mxu0
  %v752 = vadd.f32 %v59, %v751
  %v753 = vpop.f32.mrb[0].mxu0
  %754 = vmatprep.mubr.f32.mxu0 0.0
  %755 = vmatmul.mubr.f32.gmra.mrb[0].mxu0 %v547
  %v756 = vpop.f32.mrb[0].mxu0
  %v757 = vadd.f32 %v59, %v756
  %v758 = vpop.f32.mrb[0].mxu0
  %759 = vmatprep.mubr.f32.mxu0 0.0
  %760 = vmatmul.mubr.f32.gmra.mrb[0].mxu0 %v550
  %v761 = vpop.f32.mrb[0].mxu0
  %v762 = vadd.f32 %v59, %v761
  %v763 = vpop.f32.mrb[0].mxu0
  %764 = vmatprep.mubr.f32.mxu0 0.0
  %765 = vmatmul.mubr.f32.gmra.mrb[0].mxu0 %v553
  %v766 = vpop.f32.mrb[0].mxu0
  %v767 = vadd.f32 %v59, %v766
  %v768 = vpop.f32.mrb[0].mxu0
  %769 = vmatprep.mubr.f32.mxu0 0.0
  %770 = vmatmul.mubr.f32.gmra.mrb[0].mxu0 %v556
  %v771 = vpop.f32.mrb[0].mxu0
  %v772 = vadd.f32 %v59, %v771
  %v773 = vpop.f32.mrb[0].mxu0
  %774 = vmatprep.mubr.f32.mxu0 0.0
  %775 = vmatmul.mubr.f32.gmra.mrb[0].mxu0 %v559
  %v776 = vpop.f32.mrb[0].mxu0
  %v777 = vadd.f32 %v59, %v776
  %v778 = vpop.f32.mrb[0].mxu0
  %779 = vmatprep.mubr.f32.mxu0 0.0
  %780 = vmatmul.mubr.f32.gmra.mrb[0].mxu0 %v562
  %v781 = vpop.f32.mrb[0].mxu0
  %v782 = vadd.f32 %v59, %v781
  %v783 = vpop.f32.mrb[0].mxu0
  %784 = vmatprep.mubr.f32.mxu0 0.0
  %785 = vmatmul.mubr.f32.gmra.mrb[0].mxu0 %v565
  %v786 = vpop.f32.mrb[0].mxu0
  %v787 = vadd.f32 %v59, %v786
  %v788 = vpop.f32.mrb[0].mxu0
  %789 = vmatprep.mubr.f32.mxu0 0.0
  %790 = vmatmul.mubr.f32.gmra.mrb[0].mxu0 %v568
  %v791 = vpop.f32.mrb[0].mxu0
  %v792 = vadd.f32 %v59, %v791
  %v793 = vpop.f32.mrb[0].mxu0
  %794 = vmatprep.mubr.f32.mxu0 0.0
  %795 = vmatmul.mubr.f32.gmra.mrb[0].mxu0 %v571
  %v796 = vpop.f32.mrb[0].mxu0
  %v797 = vadd.f32 %v59, %v796
  %v798 = vpop.f32.mrb[0].mxu0
  %799 = vmatprep.mubr.f32.mxu0 0.0
  %800 = vmatmul.mubr.f32.gmra.mrb[0].mxu0 %v574
  %v801 = vpop.f32.mrb[0].mxu0
  %v802 = vadd.f32 %v59, %v801
  %v803 = vpop.f32.mrb[0].mxu0
  %804 = vmatprep.mubr.f32.mxu0 0.0
  %805 = vmatmul.mubr.f32.gmra.mrb[0].mxu0 %v577
  %v806 = vpop.f32.mrb[0].mxu0
  %v807 = vadd.f32 %v59, %v806
  %v808 = vpop.f32.mrb[0].mxu0
  %809 = vmatprep.mubr.f32.mxu0 0.0
  %810 = vmatmul.mubr.f32.gmra.mrb[0].mxu0 %v580
  %v811 = vpop.f32.mrb[0].mxu0
  %v812 = vadd.f32 %v59, %v811
  %v813 = vpop.f32.mrb[0].mxu0
  %814 = vmatprep.mubr.f32.mxu0 0.0
  %815 = vmatmul.mubr.f32.gmra.mrb[0].mxu0 %v583
  %v816 = vpop.f32.mrb[0].mxu0
  %v817 = vadd.f32 %v59, %v816
  %v818 = vpop.f32.mrb[0].mxu0
  %819 = vmatprep.mubr.f32.mxu0 0.0
  %820 = vmatmul.mubr.f32.gmra.mrb[0].mxu0 %v586
  %v821 = vpop.f32.mrb[0].mxu0
  %v822 = vadd.f32 %v59, %v821
  %v823 = vpop.f32.mrb[0].mxu0
  %824 = vmatprep.mubr.f32.mxu0 0.0
  %825 = vmatmul.mubr.f32.gmra.mrb[0].mxu0 %v589
  %v826 = vpop.f32.mrb[0].mxu0
  %v827 = vadd.f32 %v59, %v826
  %v828 = vpop.f32.mrb[0].mxu0
  %829 = vmatprep.mubr.f32.mxu0 0.0
  %830 = vmatmul.mubr.f32.gmra.mrb[0].mxu0 %v592
  %v831 = vpop.f32.mrb[0].mxu0
  %v832 = vadd.f32 %v59, %v831
  %v833 = vpop.f32.mrb[0].mxu0
  %834 = vmatprep.mubr.f32.mxu0 0.0
  %835 = vmatmul.mubr.f32.gmra.mrb[0].mxu0 %v595
  %v836 = vpop.f32.mrb[0].mxu0
  %v837 = vadd.f32 %v59, %v836
  %v838 = vpop.f32.mrb[0].mxu0
  %839 = vmatprep.mubr.f32.mxu0 0.0
  %840 = vmatmul.mubr.f32.gmra.mrb[0].mxu0 %v598
  %v841 = vpop.f32.mrb[0].mxu0
  %v842 = vadd.f32 %v59, %v841
  %v843 = vpop.f32.mrb[0].mxu0
  %844 = vdwg.mxu0
  %v845 = vmax.f32 %v667, 0.0
  %v846 = vmax.f32 %v672, 0.0
  %v847 = vmax.f32 %v677, 0.0
  %v848 = vmax.f32 %v682, 0.0
  %v849 = vmax.f32 %v687, 0.0
  %v850 = vmax.f32 %v692, 0.0
  %v851 = vmax.f32 %v697, 0.0
  %v852 = vmax.f32 %v702, 0.0
  %v853 = vmax.f32 %v707, 0.0
  %v854 = vmax.f32 %v712, 0.0
  %v855 = vmax.f32 %v717, 0.0
  %v856 = vmax.f32 %v722, 0.0
  %v857 = vmax.f32 %v727, 0.0
  %v858 = vmax.f32 %v732, 0.0
  %v859 = vmax.f32 %v737, 0.0
  %v860 = vmax.f32 %v742, 0.0
  %v861 = vmax.f32 %v747, 0.0
  %v862 = vmax.f32 %v752, 0.0
  %v863 = vmax.f32 %v757, 0.0
  %v864 = vmax.f32 %v762, 0.0
  %v865 = vmax.f32 %v767, 0.0
  %v866 = vmax.f32 %v772, 0.0
  %v867 = vmax.f32 %v777, 0.0
  %v868 = vmax.f32 %v782, 0.0
  %v869 = vmax.f32 %v787, 0.0
  %v870 = vmax.f32 %v792, 0.0
  %v871 = vmax.f32 %v797, 0.0
  %v872 = vmax.f32 %v802, 0.0
  %v873 = vmax.f32 %v807, 0.0
  %v874 = vmax.f32 %v812, 0.0
  %v875 = vmax.f32 %v817, 0.0
  %v876 = vmax.f32 %v822, 0.0
  %v877 = vmax.f32 %v827, 0.0
  %v878 = vmax.f32 %v832, 0.0
  %v879 = vmax.f32 %v837, 0.0
  %v880 = vmax.f32 %v842, 0.0
  %v881 = vmax.f32 %v419, %v845
  %v882 = vmax.f32 %v420, %v846
  %v883 = vmax.f32 %v421, %v847
  %v884 = vmax.f32 %v422, %v848
  %v885 = vmax.f32 %v423, %v849
  %v886 = vmax.f32 %v424, %v850
  %v887 = vmax.f32 %v425, %v851
  %v888 = vmax.f32 %v426, %v852
  %v889 = vmax.f32 %v427, %v853
  %v890 = vmax.f32 %v428, %v854
  %v891 = vmax.f32 %v429, %v855
  %v892 = vmax.f32 %v430, %v856
  %v893 = vmax.f32 %v431, %v857
  %v894 = vmax.f32 %v432, %v858
  %v895 = vmax.f32 %v433, %v859
  %v896 = vmax.f32 %v434, %v860
  %v897 = vmax.f32 %v435, %v861
  %v898 = vmax.f32 %v436, %v862
  %v899 = vmax.f32 %v437, %v863
  %v900 = vmax.f32 %v438, %v864
  %v901 = vmax.f32 %v439, %v865
  %v902 = vmax.f32 %v440, %v866
  %v903 = vmax.f32 %v441, %v867
  %v904 = vmax.f32 %v442, %v868
  %v905 = vmax.f32 %v443, %v869
  %v906 = vmax.f32 %v444, %v870
  %v907 = vmax.f32 %v445, %v871
  %v908 = vmax.f32 %v446, %v872
  %v909 = vmax.f32 %v447, %v873
  %v910 = vmax.f32 %v448, %v874
  %v911 = vmax.f32 %v449, %v875
  %v912 = vmax.f32 %v450, %v876
  %v913 = vmax.f32 %v451, %v877
  %v914 = vmax.f32 %v452, %v878
  %v915 = vmax.f32 %v453, %v879
  %v916 = vmax.f32 %v454, %v880
  %s917 = scalar_lea.vmem %s0, 576
  %v918 = vld [vmem:[%s917] sm:$0xff]
  %v919 = vld [vmem:[%s917 + $0x8] sm:$0xff]
  %v920 = vld [vmem:[%s917 + $0x10] sm:$0xff]
  %v921 = vld [vmem:[%s917 + $0x18] sm:$0xff]
  %v922 = vld [vmem:[%s917 + $0x20] sm:$0xff]
  %v923 = vld [vmem:[%s917 + $0x28] sm:$0xff]
  %v924 = vld [vmem:[%s917 + $0x30] sm:$0xff]
  %v925 = vld [vmem:[%s917 + $0x38] sm:$0xff]
  %v926 = vld [vmem:[%s917 + $0x40] sm:$0xff]
  %v927 = vld [vmem:[%s917 + $0x48] sm:$0xff]
  %v928 = vld [vmem:[%s917 + $0x50] sm:$0xff]
  %v929 = vld [vmem:[%s917 + $0x58] sm:$0xff]
  %v930 = vld [vmem:[%s917 + $0x60] sm:$0xff]
  %v931 = vld [vmem:[%s917 + $0x68] sm:$0xff]
  %v932 = vld [vmem:[%s917 + $0x70] sm:$0xff]
  %v933 = vld [vmem:[%s917 + $0x78] sm:$0xff]
  %v934 = vld [vmem:[%s917 + $0x80] sm:$0xff]
  %v935 = vld [vmem:[%s917 + $0x88] sm:$0xff]
  %v936 = vld [vmem:[%s917 + $0x90] sm:$0xff]
  %v937 = vld [vmem:[%s917 + $0x98] sm:$0xff]
  %v938 = vld [vmem:[%s917 + $0xa0] sm:$0xff]
  %v939 = vld [vmem:[%s917 + $0xa8] sm:$0xff]
  %v940 = vld [vmem:[%s917 + $0xb0] sm:$0xff]
  %v941 = vld [vmem:[%s917 + $0xb8] sm:$0xff]
  %v942 = vld [vmem:[%s917 + $0xc0] sm:$0xff]
  %v943 = vld [vmem:[%s917 + $0xc8] sm:$0xff]
  %v944 = vld [vmem:[%s917 + $0xd0] sm:$0xff]
  %v945 = vld [vmem:[%s917 + $0xd8] sm:$0xff]
  %v946 = vld [vmem:[%s917 + $0xe0] sm:$0xff]
  %v947 = vld [vmem:[%s917 + $0xe8] sm:$0xff]
  %v948 = vld [vmem:[%s917 + $0xf0] sm:$0xff]
  %v949 = vld [vmem:[%s917 + $0xf8] sm:$0xff]
  %v950 = vld [vmem:[%s917 + $0x100] sm:$0xff]
  %v951 = vld [vmem:[%s917 + $0x108] sm:$0xff]
  %v952 = vld [vmem:[%s917 + $0x110] sm:$0xff]
  %v953 = vld [vmem:[%s917 + $0x118] sm:$0xff]
  %v955 = vsel %vm61, %v918, 0
  %v958 = vsel %vm61, %v919, 0
  %v961 = vsel %vm61, %v920, 0
  %v964 = vsel %vm61, %v921, 0
  %v967 = vsel %vm61, %v922, 0
  %v970 = vsel %vm61, %v923, 0
  %v973 = vsel %vm61, %v924, 0
  %v976 = vsel %vm61, %v925, 0
  %v979 = vsel %vm61, %v926, 0
  %v982 = vsel %vm61, %v927, 0
  %v985 = vsel %vm61, %v928, 0
  %v988 = vsel %vm61, %v929, 0
  %v991 = vsel %vm61, %v930, 0
  %v994 = vsel %vm61, %v931, 0
  %v997 = vsel %vm61, %v932, 0
  %v1000 = vsel %vm61, %v933, 0
  %v1003 = vsel %vm61, %v934, 0
  %v1006 = vsel %vm61, %v935, 0
  %v1009 = vsel %vm61, %v936, 0
  %v1012 = vsel %vm61, %v937, 0
  %v1015 = vsel %vm61, %v938, 0
  %v1018 = vsel %vm61, %v939, 0
  %v1021 = vsel %vm61, %v940, 0
  %v1024 = vsel %vm61, %v941, 0
  %v1027 = vsel %vm61, %v942, 0
  %v1030 = vsel %vm61, %v943, 0
  %v1033 = vsel %vm61, %v944, 0
  %v1036 = vsel %vm61, %v945, 0
  %v1039 = vsel %vm61, %v946, 0
  %v1042 = vsel %vm61, %v947, 0
  %v1045 = vsel %vm61, %v948, 0
  %v1048 = vsel %vm61, %v949, 0
  %v1051 = vsel %vm61, %v950, 0
  %v1054 = vsel %vm61, %v951, 0
  %v1057 = vsel %vm61, %v952, 0
  %v1060 = vsel %vm61, %v953, 0
  %1062 = vmatprep.subr.mxu0 0.0
  %1063 = vmatpush1.msra.mxu0 %v14
  %1064 = vmatprep.subr.mxu0 0.0
  %1065 = vmatpush1.msra.mxu0 %v15
  %1066 = vmatprep.subr.mxu0 0.0
  %1067 = vmatpush1.msra.mxu0 %v16
  %1068 = vmatprep.subr.mxu0 0.0
  %1069 = vmatpush1.msra.mxu0 %v172
  %1070 = vmatprep.subr.mxu0 0.0
  %1071 = vmatpush1.msra.mxu0 0.0
  %1072 = vmatprep.subr.mxu0 0.0
  %1073 = vmatpush1.msra.mxu0 0.0
  %1074 = vmatprep.subr.mxu0 0.0
  %1075 = vmatpush1.msra.mxu0 0.0
  %1076 = vmatprep.subr.mxu0 0.0
  %1077 = vmatpush1.msra.mxu0 0.0
  %1078 = vmatprep.subr.mxu0 0.0
  %1079 = vmatpush1.msra.mxu0 0.0
  %1080 = vmatprep.subr.mxu0 0.0
  %1081 = vmatpush1.msra.mxu0 0.0
  %1082 = vmatprep.subr.mxu0 0.0
  %1083 = vmatpush1.msra.mxu0 0.0
  %1084 = vmatprep.subr.mxu0 0.0
  %1085 = vmatpush1.msra.mxu0 0.0
  %1086 = vmatprep.subr.mxu0 0.0
  %1087 = vmatpush1.msra.mxu0 0.0
  %1088 = vmatprep.subr.mxu0 0.0
  %1089 = vmatpush1.msra.mxu0 0.0
  %1090 = vmatprep.subr.mxu0 0.0
  %1091 = vmatpush1.msra.mxu0 0.0
  %1092 = vmatprep.subr.mxu0 0.0
  %1093 = vmatpush1.msra.mxu0 0.0
  %1094 = vmatprep.subr.mxu0 0.0
  %1095 = vmatpush1.msra.mxu0 0.0
  %1096 = vmatprep.subr.mxu0 0.0
  %1097 = vmatpush1.msra.mxu0 0.0
  %1098 = vmatprep.subr.mxu0 0.0
  %1099 = vmatpush1.msra.mxu0 0.0
  %1100 = vmatprep.subr.mxu0 0.0
  %1101 = vmatpush1.msra.mxu0 0.0
  %1102 = vmatprep.subr.mxu0 0.0
  %1103 = vmatpush1.msra.mxu0 0.0
  %1104 = vmatprep.subr.mxu0 0.0
  %1105 = vmatpush1.msra.mxu0 0.0
  %1106 = vmatprep.subr.mxu0 0.0
  %1107 = vmatpush1.msra.mxu0 0.0
  %1108 = vmatprep.subr.mxu0 0.0
  %1109 = vmatpush1.msra.mxu0 0.0
  %1110 = vmatprep.subr.mxu0 0.0
  %1111 = vmatpush1.msra.mxu0 0.0
  %1112 = vmatprep.subr.mxu0 0.0
  %1113 = vmatpush1.msra.mxu0 0.0
  %1114 = vmatprep.subr.mxu0 0.0
  %1115 = vmatpush1.msra.mxu0 0.0
  %1116 = vmatprep.subr.mxu0 0.0
  %1117 = vmatpush1.msra.mxu0 0.0
  %1118 = vmatprep.subr.mxu0 0.0
  %1119 = vmatpush1.msra.mxu0 0.0
  %1120 = vmatprep.subr.mxu0 0.0
  %1121 = vmatpush1.msra.mxu0 0.0
  %1122 = vmatprep.subr.mxu0 0.0
  %1123 = vmatpush1.msra.mxu0 0.0
  %1124 = vmatprep.subr.mxu0 0.0
  %1125 = vmatpush1.msra.mxu0 0.0
  %1126 = vmatprep.mubr.f32.mxu0 0.0
  %1127 = vmatmul.mubr.f32.gmra.mrb[0].mxu0 %v955
  %v1128 = vpop.f32.mrb[0].mxu0
  %v1129 = vadd.f32 %v59, %v1128
  %v1130 = vpop.f32.mrb[0].mxu0
  %1131 = vmatprep.mubr.f32.mxu0 0.0
  %1132 = vmatmul.mubr.f32.gmra.mrb[0].mxu0 %v958
  %v1133 = vpop.f32.mrb[0].mxu0
  %v1134 = vadd.f32 %v59, %v1133
  %v1135 = vpop.f32.mrb[0].mxu0
  %1136 = vmatprep.mubr.f32.mxu0 0.0
  %1137 = vmatmul.mubr.f32.gmra.mrb[0].mxu0 %v961
  %v1138 = vpop.f32.mrb[0].mxu0
  %v1139 = vadd.f32 %v59, %v1138
  %v1140 = vpop.f32.mrb[0].mxu0
  %1141 = vmatprep.mubr.f32.mxu0 0.0
  %1142 = vmatmul.mubr.f32.gmra.mrb[0].mxu0 %v964
  %v1143 = vpop.f32.mrb[0].mxu0
  %v1144 = vadd.f32 %v59, %v1143
  %v1145 = vpop.f32.mrb[0].mxu0
  %1146 = vmatprep.mubr.f32.mxu0 0.0
  %1147 = vmatmul.mubr.f32.gmra.mrb[0].mxu0 %v967
  %v1148 = vpop.f32.mrb[0].mxu0
  %v1149 = vadd.f32 %v59, %v1148
  %v1150 = vpop.f32.mrb[0].mxu0
  %1151 = vmatprep.mubr.f32.mxu0 0.0
  %1152 = vmatmul.mubr.f32.gmra.mrb[0].mxu0 %v970
  %v1153 = vpop.f32.mrb[0].mxu0
  %v1154 = vadd.f32 %v59, %v1153
  %v1155 = vpop.f32.mrb[0].mxu0
  %1156 = vmatprep.mubr.f32.mxu0 0.0
  %1157 = vmatmul.mubr.f32.gmra.mrb[0].mxu0 %v973
  %v1158 = vpop.f32.mrb[0].mxu0
  %v1159 = vadd.f32 %v59, %v1158
  %v1160 = vpop.f32.mrb[0].mxu0
  %1161 = vmatprep.mubr.f32.mxu0 0.0
  %1162 = vmatmul.mubr.f32.gmra.mrb[0].mxu0 %v976
  %v1163 = vpop.f32.mrb[0].mxu0
  %v1164 = vadd.f32 %v59, %v1163
  %v1165 = vpop.f32.mrb[0].mxu0
  %1166 = vmatprep.mubr.f32.mxu0 0.0
  %1167 = vmatmul.mubr.f32.gmra.mrb[0].mxu0 %v979
  %v1168 = vpop.f32.mrb[0].mxu0
  %v1169 = vadd.f32 %v59, %v1168
  %v1170 = vpop.f32.mrb[0].mxu0
  %1171 = vmatprep.mubr.f32.mxu0 0.0
  %1172 = vmatmul.mubr.f32.gmra.mrb[0].mxu0 %v982
  %v1173 = vpop.f32.mrb[0].mxu0
  %v1174 = vadd.f32 %v59, %v1173
  %v1175 = vpop.f32.mrb[0].mxu0
  %1176 = vmatprep.mubr.f32.mxu0 0.0
  %1177 = vmatmul.mubr.f32.gmra.mrb[0].mxu0 %v985
  %v1178 = vpop.f32.mrb[0].mxu0
  %v1179 = vadd.f32 %v59, %v1178
  %v1180 = vpop.f32.mrb[0].mxu0
  %1181 = vmatprep.mubr.f32.mxu0 0.0
  %1182 = vmatmul.mubr.f32.gmra.mrb[0].mxu0 %v988
  %v1183 = vpop.f32.mrb[0].mxu0
  %v1184 = vadd.f32 %v59, %v1183
  %v1185 = vpop.f32.mrb[0].mxu0
  %1186 = vmatprep.mubr.f32.mxu0 0.0
  %1187 = vmatmul.mubr.f32.gmra.mrb[0].mxu0 %v991
  %v1188 = vpop.f32.mrb[0].mxu0
  %v1189 = vadd.f32 %v59, %v1188
  %v1190 = vpop.f32.mrb[0].mxu0
  %1191 = vmatprep.mubr.f32.mxu0 0.0
  %1192 = vmatmul.mubr.f32.gmra.mrb[0].mxu0 %v994
  %v1193 = vpop.f32.mrb[0].mxu0
  %v1194 = vadd.f32 %v59, %v1193
  %v1195 = vpop.f32.mrb[0].mxu0
  %1196 = vmatprep.mubr.f32.mxu0 0.0
  %1197 = vmatmul.mubr.f32.gmra.mrb[0].mxu0 %v997
  %v1198 = vpop.f32.mrb[0].mxu0
  %v1199 = vadd.f32 %v59, %v1198
  %v1200 = vpop.f32.mrb[0].mxu0
  %1201 = vmatprep.mubr.f32.mxu0 0.0
  %1202 = vmatmul.mubr.f32.gmra.mrb[0].mxu0 %v1000
  %v1203 = vpop.f32.mrb[0].mxu0
  %v1204 = vadd.f32 %v59, %v1203
  %v1205 = vpop.f32.mrb[0].mxu0
  %1206 = vmatprep.mubr.f32.mxu0 0.0
  %1207 = vmatmul.mubr.f32.gmra.mrb[0].mxu0 %v1003
  %v1208 = vpop.f32.mrb[0].mxu0
  %v1209 = vadd.f32 %v59, %v1208
  %v1210 = vpop.f32.mrb[0].mxu0
  %1211 = vmatprep.mubr.f32.mxu0 0.0
  %1212 = vmatmul.mubr.f32.gmra.mrb[0].mxu0 %v1006
  %v1213 = vpop.f32.mrb[0].mxu0
  %v1214 = vadd.f32 %v59, %v1213
  %v1215 = vpop.f32.mrb[0].mxu0
  %1216 = vmatprep.mubr.f32.mxu0 0.0
  %1217 = vmatmul.mubr.f32.gmra.mrb[0].mxu0 %v1009
  %v1218 = vpop.f32.mrb[0].mxu0
  %v1219 = vadd.f32 %v59, %v1218
  %v1220 = vpop.f32.mrb[0].mxu0
  %1221 = vmatprep.mubr.f32.mxu0 0.0
  %1222 = vmatmul.mubr.f32.gmra.mrb[0].mxu0 %v1012
  %v1223 = vpop.f32.mrb[0].mxu0
  %v1224 = vadd.f32 %v59, %v1223
  %v1225 = vpop.f32.mrb[0].mxu0
  %1226 = vmatprep.mubr.f32.mxu0 0.0
  %1227 = vmatmul.mubr.f32.gmra.mrb[0].mxu0 %v1015
  %v1228 = vpop.f32.mrb[0].mxu0
  %v1229 = vadd.f32 %v59, %v1228
  %v1230 = vpop.f32.mrb[0].mxu0
  %1231 = vmatprep.mubr.f32.mxu0 0.0
  %1232 = vmatmul.mubr.f32.gmra.mrb[0].mxu0 %v1018
  %v1233 = vpop.f32.mrb[0].mxu0
  %v1234 = vadd.f32 %v59, %v1233
  %v1235 = vpop.f32.mrb[0].mxu0
  %1236 = vmatprep.mubr.f32.mxu0 0.0
  %1237 = vmatmul.mubr.f32.gmra.mrb[0].mxu0 %v1021
  %v1238 = vpop.f32.mrb[0].mxu0
  %v1239 = vadd.f32 %v59, %v1238
  %v1240 = vpop.f32.mrb[0].mxu0
  %1241 = vmatprep.mubr.f32.mxu0 0.0
  %1242 = vmatmul.mubr.f32.gmra.mrb[0].mxu0 %v1024
  %v1243 = vpop.f32.mrb[0].mxu0
  %v1244 = vadd.f32 %v59, %v1243
  %v1245 = vpop.f32.mrb[0].mxu0
  %1246 = vmatprep.mubr.f32.mxu0 0.0
  %1247 = vmatmul.mubr.f32.gmra.mrb[0].mxu0 %v1027
  %v1248 = vpop.f32.mrb[0].mxu0
  %v1249 = vadd.f32 %v59, %v1248
  %v1250 = vpop.f32.mrb[0].mxu0
  %1251 = vmatprep.mubr.f32.mxu0 0.0
  %1252 = vmatmul.mubr.f32.gmra.mrb[0].mxu0 %v1030
  %v1253 = vpop.f32.mrb[0].mxu0
  %v1254 = vadd.f32 %v59, %v1253
  %v1255 = vpop.f32.mrb[0].mxu0
  %1256 = vmatprep.mubr.f32.mxu0 0.0
  %1257 = vmatmul.mubr.f32.gmra.mrb[0].mxu0 %v1033
  %v1258 = vpop.f32.mrb[0].mxu0
  %v1259 = vadd.f32 %v59, %v1258
  %v1260 = vpop.f32.mrb[0].mxu0
  %1261 = vmatprep.mubr.f32.mxu0 0.0
  %1262 = vmatmul.mubr.f32.gmra.mrb[0].mxu0 %v1036
  %v1263 = vpop.f32.mrb[0].mxu0
  %v1264 = vadd.f32 %v59, %v1263
  %v1265 = vpop.f32.mrb[0].mxu0
  %1266 = vmatprep.mubr.f32.mxu0 0.0
  %1267 = vmatmul.mubr.f32.gmra.mrb[0].mxu0 %v1039
  %v1268 = vpop.f32.mrb[0].mxu0
  %v1269 = vadd.f32 %v59, %v1268
  %v1270 = vpop.f32.mrb[0].mxu0
  %1271 = vmatprep.mubr.f32.mxu0 0.0
  %1272 = vmatmul.mubr.f32.gmra.mrb[0].mxu0 %v1042
  %v1273 = vpop.f32.mrb[0].mxu0
  %v1274 = vadd.f32 %v59, %v1273
  %v1275 = vpop.f32.mrb[0].mxu0
  %1276 = vmatprep.mubr.f32.mxu0 0.0
  %1277 = vmatmul.mubr.f32.gmra.mrb[0].mxu0 %v1045
  %v1278 = vpop.f32.mrb[0].mxu0
  %v1279 = vadd.f32 %v59, %v1278
  %v1280 = vpop.f32.mrb[0].mxu0
  %1281 = vmatprep.mubr.f32.mxu0 0.0
  %1282 = vmatmul.mubr.f32.gmra.mrb[0].mxu0 %v1048
  %v1283 = vpop.f32.mrb[0].mxu0
  %v1284 = vadd.f32 %v59, %v1283
  %v1285 = vpop.f32.mrb[0].mxu0
  %1286 = vmatprep.mubr.f32.mxu0 0.0
  %1287 = vmatmul.mubr.f32.gmra.mrb[0].mxu0 %v1051
  %v1288 = vpop.f32.mrb[0].mxu0
  %v1289 = vadd.f32 %v59, %v1288
  %v1290 = vpop.f32.mrb[0].mxu0
  %1291 = vmatprep.mubr.f32.mxu0 0.0
  %1292 = vmatmul.mubr.f32.gmra.mrb[0].mxu0 %v1054
  %v1293 = vpop.f32.mrb[0].mxu0
  %v1294 = vadd.f32 %v59, %v1293
  %v1295 = vpop.f32.mrb[0].mxu0
  %1296 = vmatprep.mubr.f32.mxu0 0.0
  %1297 = vmatmul.mubr.f32.gmra.mrb[0].mxu0 %v1057
  %v1298 = vpop.f32.mrb[0].mxu0
  %v1299 = vadd.f32 %v59, %v1298
  %v1300 = vpop.f32.mrb[0].mxu0
  %1301 = vmatprep.mubr.f32.mxu0 0.0
  %1302 = vmatmul.mubr.f32.gmra.mrb[0].mxu0 %v1060
  %v1303 = vpop.f32.mrb[0].mxu0
  %v1304 = vadd.f32 %v59, %v1303
  %v1305 = vpop.f32.mrb[0].mxu0
  %1306 = vdwg.mxu0
  %v1307 = vmax.f32 %v1129, 0.0
  %v1308 = vmax.f32 %v1134, 0.0
  %v1309 = vmax.f32 %v1139, 0.0
  %v1310 = vmax.f32 %v1144, 0.0
  %v1311 = vmax.f32 %v1149, 0.0
  %v1312 = vmax.f32 %v1154, 0.0
  %v1313 = vmax.f32 %v1159, 0.0
  %v1314 = vmax.f32 %v1164, 0.0
  %v1315 = vmax.f32 %v1169, 0.0
  %v1316 = vmax.f32 %v1174, 0.0
  %v1317 = vmax.f32 %v1179, 0.0
  %v1318 = vmax.f32 %v1184, 0.0
  %v1319 = vmax.f32 %v1189, 0.0
  %v1320 = vmax.f32 %v1194, 0.0
  %v1321 = vmax.f32 %v1199, 0.0
  %v1322 = vmax.f32 %v1204, 0.0
  %v1323 = vmax.f32 %v1209, 0.0
  %v1324 = vmax.f32 %v1214, 0.0
  %v1325 = vmax.f32 %v1219, 0.0
  %v1326 = vmax.f32 %v1224, 0.0
  %v1327 = vmax.f32 %v1229, 0.0
  %v1328 = vmax.f32 %v1234, 0.0
  %v1329 = vmax.f32 %v1239, 0.0
  %v1330 = vmax.f32 %v1244, 0.0
  %v1331 = vmax.f32 %v1249, 0.0
  %v1332 = vmax.f32 %v1254, 0.0
  %v1333 = vmax.f32 %v1259, 0.0
  %v1334 = vmax.f32 %v1264, 0.0
  %v1335 = vmax.f32 %v1269, 0.0
  %v1336 = vmax.f32 %v1274, 0.0
  %v1337 = vmax.f32 %v1279, 0.0
  %v1338 = vmax.f32 %v1284, 0.0
  %v1339 = vmax.f32 %v1289, 0.0
  %v1340 = vmax.f32 %v1294, 0.0
  %v1341 = vmax.f32 %v1299, 0.0
  %v1342 = vmax.f32 %v1304, 0.0
  %s1343 = scalar_lea.vmem %s0, 864
  %v1344 = vld [vmem:[%s1343] sm:$0xff]
  %v1345 = vld [vmem:[%s1343 + $0x8] sm:$0xff]
  %v1346 = vld [vmem:[%s1343 + $0x10] sm:$0xff]
  %v1347 = vld [vmem:[%s1343 + $0x18] sm:$0xff]
  %v1348 = vld [vmem:[%s1343 + $0x20] sm:$0xff]
  %v1349 = vld [vmem:[%s1343 + $0x28] sm:$0xff]
  %v1350 = vld [vmem:[%s1343 + $0x30] sm:$0xff]
  %v1351 = vld [vmem:[%s1343 + $0x38] sm:$0xff]
  %v1352 = vld [vmem:[%s1343 + $0x40] sm:$0xff]
  %v1353 = vld [vmem:[%s1343 + $0x48] sm:$0xff]
  %v1354 = vld [vmem:[%s1343 + $0x50] sm:$0xff]
  %v1355 = vld [vmem:[%s1343 + $0x58] sm:$0xff]
  %v1356 = vld [vmem:[%s1343 + $0x60] sm:$0xff]
  %v1357 = vld [vmem:[%s1343 + $0x68] sm:$0xff]
  %v1358 = vld [vmem:[%s1343 + $0x70] sm:$0xff]
  %v1359 = vld [vmem:[%s1343 + $0x78] sm:$0xff]
  %v1360 = vld [vmem:[%s1343 + $0x80] sm:$0xff]
  %v1361 = vld [vmem:[%s1343 + $0x88] sm:$0xff]
  %v1362 = vld [vmem:[%s1343 + $0x90] sm:$0xff]
  %v1363 = vld [vmem:[%s1343 + $0x98] sm:$0xff]
  %v1364 = vld [vmem:[%s1343 + $0xa0] sm:$0xff]
  %v1365 = vld [vmem:[%s1343 + $0xa8] sm:$0xff]
  %v1366 = vld [vmem:[%s1343 + $0xb0] sm:$0xff]
  %v1367 = vld [vmem:[%s1343 + $0xb8] sm:$0xff]
  %v1368 = vld [vmem:[%s1343 + $0xc0] sm:$0xff]
  %v1369 = vld [vmem:[%s1343 + $0xc8] sm:$0xff]
  %v1370 = vld [vmem:[%s1343 + $0xd0] sm:$0xff]
  %v1371 = vld [vmem:[%s1343 + $0xd8] sm:$0xff]
  %v1372 = vld [vmem:[%s1343 + $0xe0] sm:$0xff]
  %v1373 = vld [vmem:[%s1343 + $0xe8] sm:$0xff]
  %v1374 = vld [vmem:[%s1343 + $0xf0] sm:$0xff]
  %v1375 = vld [vmem:[%s1343 + $0xf8] sm:$0xff]
  %v1376 = vld [vmem:[%s1343 + $0x100] sm:$0xff]
  %v1377 = vld [vmem:[%s1343 + $0x108] sm:$0xff]
  %v1378 = vld [vmem:[%s1343 + $0x110] sm:$0xff]
  %v1379 = vld [vmem:[%s1343 + $0x118] sm:$0xff]
  %v1381 = vsel %vm61, %v1344, 0
  %v1384 = vsel %vm61, %v1345, 0
  %v1387 = vsel %vm61, %v1346, 0
  %v1390 = vsel %vm61, %v1347, 0
  %v1393 = vsel %vm61, %v1348, 0
  %v1396 = vsel %vm61, %v1349, 0
  %v1399 = vsel %vm61, %v1350, 0
  %v1402 = vsel %vm61, %v1351, 0
  %v1405 = vsel %vm61, %v1352, 0
  %v1408 = vsel %vm61, %v1353, 0
  %v1411 = vsel %vm61, %v1354, 0
  %v1414 = vsel %vm61, %v1355, 0
  %v1417 = vsel %vm61, %v1356, 0
  %v1420 = vsel %vm61, %v1357, 0
  %v1423 = vsel %vm61, %v1358, 0
  %v1426 = vsel %vm61, %v1359, 0
  %v1429 = vsel %vm61, %v1360, 0
  %v1432 = vsel %vm61, %v1361, 0
  %v1435 = vsel %vm61, %v1362, 0
  %v1438 = vsel %vm61, %v1363, 0
  %v1441 = vsel %vm61, %v1364, 0
  %v1444 = vsel %vm61, %v1365, 0
  %v1447 = vsel %vm61, %v1366, 0
  %v1450 = vsel %vm61, %v1367, 0
  %v1453 = vsel %vm61, %v1368, 0
  %v1456 = vsel %vm61, %v1369, 0
  %v1459 = vsel %vm61, %v1370, 0
  %v1462 = vsel %vm61, %v1371, 0
  %v1465 = vsel %vm61, %v1372, 0
  %v1468 = vsel %vm61, %v1373, 0
  %v1471 = vsel %vm61, %v1374, 0
  %v1474 = vsel %vm61, %v1375, 0
  %v1477 = vsel %vm61, %v1376, 0
  %v1480 = vsel %vm61, %v1377, 0
  %v1483 = vsel %vm61, %v1378, 0
  %v1486 = vsel %vm61, %v1379, 0
  %1488 = vmatprep.subr.mxu0 0.0
  %1489 = vmatpush1.msra.mxu0 %v14
  %1490 = vmatprep.subr.mxu0 0.0
  %1491 = vmatpush1.msra.mxu0 %v15
  %1492 = vmatprep.subr.mxu0 0.0
  %1493 = vmatpush1.msra.mxu0 %v16
  %1494 = vmatprep.subr.mxu0 0.0
  %1495 = vmatpush1.msra.mxu0 %v172
  %1496 = vmatprep.subr.mxu0 0.0
  %1497 = vmatpush1.msra.mxu0 0.0
  %1498 = vmatprep.subr.mxu0 0.0
  %1499 = vmatpush1.msra.mxu0 0.0
  %1500 = vmatprep.subr.mxu0 0.0
  %1501 = vmatpush1.msra.mxu0 0.0
  %1502 = vmatprep.subr.mxu0 0.0
  %1503 = vmatpush1.msra.mxu0 0.0
  %1504 = vmatprep.subr.mxu0 0.0
  %1505 = vmatpush1.msra.mxu0 0.0
  %1506 = vmatprep.subr.mxu0 0.0
  %1507 = vmatpush1.msra.mxu0 0.0
  %1508 = vmatprep.subr.mxu0 0.0
  %1509 = vmatpush1.msra.mxu0 0.0
  %1510 = vmatprep.subr.mxu0 0.0
  %1511 = vmatpush1.msra.mxu0 0.0
  %1512 = vmatprep.subr.mxu0 0.0
  %1513 = vmatpush1.msra.mxu0 0.0
  %1514 = vmatprep.subr.mxu0 0.0
  %1515 = vmatpush1.msra.mxu0 0.0
  %1516 = vmatprep.subr.mxu0 0.0
  %1517 = vmatpush1.msra.mxu0 0.0
  %1518 = vmatprep.subr.mxu0 0.0
  %1519 = vmatpush1.msra.mxu0 0.0
  %1520 = vmatprep.subr.mxu0 0.0
  %1521 = vmatpush1.msra.mxu0 0.0
  %1522 = vmatprep.subr.mxu0 0.0
  %1523 = vmatpush1.msra.mxu0 0.0
  %1524 = vmatprep.subr.mxu0 0.0
  %1525 = vmatpush1.msra.mxu0 0.0
  %1526 = vmatprep.subr.mxu0 0.0
  %1527 = vmatpush1.msra.mxu0 0.0
  %1528 = vmatprep.subr.mxu0 0.0
  %1529 = vmatpush1.msra.mxu0 0.0
  %1530 = vmatprep.subr.mxu0 0.0
  %1531 = vmatpush1.msra.mxu0 0.0
  %1532 = vmatprep.subr.mxu0 0.0
  %1533 = vmatpush1.msra.mxu0 0.0
  %1534 = vmatprep.subr.mxu0 0.0
  %1535 = vmatpush1.msra.mxu0 0.0
  %1536 = vmatprep.subr.mxu0 0.0
  %1537 = vmatpush1.msra.mxu0 0.0
  %1538 = vmatprep.subr.mxu0 0.0
  %1539 = vmatpush1.msra.mxu0 0.0
  %1540 = vmatprep.subr.mxu0 0.0
  %1541 = vmatpush1.msra.mxu0 0.0
  %1542 = vmatprep.subr.mxu0 0.0
  %1543 = vmatpush1.msra.mxu0 0.0
  %1544 = vmatprep.subr.mxu0 0.0
  %1545 = vmatpush1.msra.mxu0 0.0
  %1546 = vmatprep.subr.mxu0 0.0
  %1547 = vmatpush1.msra.mxu0 0.0
  %1548 = vmatprep.subr.mxu0 0.0
  %1549 = vmatpush1.msra.mxu0 0.0
  %1550 = vmatprep.subr.mxu0 0.0
  %1551 = vmatpush1.msra.mxu0 0.0
  %1552 = vmatprep.mubr.f32.mxu0 0.0
  %1553 = vmatmul.mubr.f32.gmra.mrb[0].mxu0 %v1381
  %v1554 = vpop.f32.mrb[0].mxu0
  %v1555 = vadd.f32 %v59, %v1554
  %v1556 = vpop.f32.mrb[0].mxu0
  %1557 = vmatprep.mubr.f32.mxu0 0.0
  %1558 = vmatmul.mubr.f32.gmra.mrb[0].mxu0 %v1384
  %v1559 = vpop.f32.mrb[0].mxu0
  %v1560 = vadd.f32 %v59, %v1559
  %v1561 = vpop.f32.mrb[0].mxu0
  %1562 = vmatprep.mubr.f32.mxu0 0.0
  %1563 = vmatmul.mubr.f32.gmra.mrb[0].mxu0 %v1387
  %v1564 = vpop.f32.mrb[0].mxu0
  %v1565 = vadd.f32 %v59, %v1564
  %v1566 = vpop.f32.mrb[0].mxu0
  %1567 = vmatprep.mubr.f32.mxu0 0.0
  %1568 = vmatmul.mubr.f32.gmra.mrb[0].mxu0 %v1390
  %v1569 = vpop.f32.mrb[0].mxu0
  %v1570 = vadd.f32 %v59, %v1569
  %v1571 = vpop.f32.mrb[0].mxu0
  %1572 = vmatprep.mubr.f32.mxu0 0.0
  %1573 = vmatmul.mubr.f32.gmra.mrb[0].mxu0 %v1393
  %v1574 = vpop.f32.mrb[0].mxu0
  %v1575 = vadd.f32 %v59, %v1574
  %v1576 = vpop.f32.mrb[0].mxu0
  %1577 = vmatprep.mubr.f32.mxu0 0.0
  %1578 = vmatmul.mubr.f32.gmra.mrb[0].mxu0 %v1396
  %v1579 = vpop.f32.mrb[0].mxu0
  %v1580 = vadd.f32 %v59, %v1579
  %v1581 = vpop.f32.mrb[0].mxu0
  %1582 = vmatprep.mubr.f32.mxu0 0.0
  %1583 = vmatmul.mubr.f32.gmra.mrb[0].mxu0 %v1399
  %v1584 = vpop.f32.mrb[0].mxu0
  %v1585 = vadd.f32 %v59, %v1584
  %v1586 = vpop.f32.mrb[0].mxu0
  %1587 = vmatprep.mubr.f32.mxu0 0.0
  %1588 = vmatmul.mubr.f32.gmra.mrb[0].mxu0 %v1402
  %v1589 = vpop.f32.mrb[0].mxu0
  %v1590 = vadd.f32 %v59, %v1589
  %v1591 = vpop.f32.mrb[0].mxu0
  %1592 = vmatprep.mubr.f32.mxu0 0.0
  %1593 = vmatmul.mubr.f32.gmra.mrb[0].mxu0 %v1405
  %v1594 = vpop.f32.mrb[0].mxu0
  %v1595 = vadd.f32 %v59, %v1594
  %v1596 = vpop.f32.mrb[0].mxu0
  %1597 = vmatprep.mubr.f32.mxu0 0.0
  %1598 = vmatmul.mubr.f32.gmra.mrb[0].mxu0 %v1408
  %v1599 = vpop.f32.mrb[0].mxu0
  %v1600 = vadd.f32 %v59, %v1599
  %v1601 = vpop.f32.mrb[0].mxu0
  %1602 = vmatprep.mubr.f32.mxu0 0.0
  %1603 = vmatmul.mubr.f32.gmra.mrb[0].mxu0 %v1411
  %v1604 = vpop.f32.mrb[0].mxu0
  %v1605 = vadd.f32 %v59, %v1604
  %v1606 = vpop.f32.mrb[0].mxu0
  %1607 = vmatprep.mubr.f32.mxu0 0.0
  %1608 = vmatmul.mubr.f32.gmra.mrb[0].mxu0 %v1414
  %v1609 = vpop.f32.mrb[0].mxu0
  %v1610 = vadd.f32 %v59, %v1609
  %v1611 = vpop.f32.mrb[0].mxu0
  %1612 = vmatprep.mubr.f32.mxu0 0.0
  %1613 = vmatmul.mubr.f32.gmra.mrb[0].mxu0 %v1417
  %v1614 = vpop.f32.mrb[0].mxu0
  %v1615 = vadd.f32 %v59, %v1614
  %v1616 = vpop.f32.mrb[0].mxu0
  %1617 = vmatprep.mubr.f32.mxu0 0.0
  %1618 = vmatmul.mubr.f32.gmra.mrb[0].mxu0 %v1420
  %v1619 = vpop.f32.mrb[0].mxu0
  %v1620 = vadd.f32 %v59, %v1619
  %v1621 = vpop.f32.mrb[0].mxu0
  %1622 = vmatprep.mubr.f32.mxu0 0.0
  %1623 = vmatmul.mubr.f32.gmra.mrb[0].mxu0 %v1423
  %v1624 = vpop.f32.mrb[0].mxu0
  %v1625 = vadd.f32 %v59, %v1624
  %v1626 = vpop.f32.mrb[0].mxu0
  %1627 = vmatprep.mubr.f32.mxu0 0.0
  %1628 = vmatmul.mubr.f32.gmra.mrb[0].mxu0 %v1426
  %v1629 = vpop.f32.mrb[0].mxu0
  %v1630 = vadd.f32 %v59, %v1629
  %v1631 = vpop.f32.mrb[0].mxu0
  %1632 = vmatprep.mubr.f32.mxu0 0.0
  %1633 = vmatmul.mubr.f32.gmra.mrb[0].mxu0 %v1429
  %v1634 = vpop.f32.mrb[0].mxu0
  %v1635 = vadd.f32 %v59, %v1634
  %v1636 = vpop.f32.mrb[0].mxu0
  %1637 = vmatprep.mubr.f32.mxu0 0.0
  %1638 = vmatmul.mubr.f32.gmra.mrb[0].mxu0 %v1432
  %v1639 = vpop.f32.mrb[0].mxu0
  %v1640 = vadd.f32 %v59, %v1639
  %v1641 = vpop.f32.mrb[0].mxu0
  %1642 = vmatprep.mubr.f32.mxu0 0.0
  %1643 = vmatmul.mubr.f32.gmra.mrb[0].mxu0 %v1435
  %v1644 = vpop.f32.mrb[0].mxu0
  %v1645 = vadd.f32 %v59, %v1644
  %v1646 = vpop.f32.mrb[0].mxu0
  %1647 = vmatprep.mubr.f32.mxu0 0.0
  %1648 = vmatmul.mubr.f32.gmra.mrb[0].mxu0 %v1438
  %v1649 = vpop.f32.mrb[0].mxu0
  %v1650 = vadd.f32 %v59, %v1649
  %v1651 = vpop.f32.mrb[0].mxu0
  %1652 = vmatprep.mubr.f32.mxu0 0.0
  %1653 = vmatmul.mubr.f32.gmra.mrb[0].mxu0 %v1441
  %v1654 = vpop.f32.mrb[0].mxu0
  %v1655 = vadd.f32 %v59, %v1654
  %v1656 = vpop.f32.mrb[0].mxu0
  %1657 = vmatprep.mubr.f32.mxu0 0.0
  %1658 = vmatmul.mubr.f32.gmra.mrb[0].mxu0 %v1444
  %v1659 = vpop.f32.mrb[0].mxu0
  %v1660 = vadd.f32 %v59, %v1659
  %v1661 = vpop.f32.mrb[0].mxu0
  %1662 = vmatprep.mubr.f32.mxu0 0.0
  %1663 = vmatmul.mubr.f32.gmra.mrb[0].mxu0 %v1447
  %v1664 = vpop.f32.mrb[0].mxu0
  %v1665 = vadd.f32 %v59, %v1664
  %v1666 = vpop.f32.mrb[0].mxu0
  %1667 = vmatprep.mubr.f32.mxu0 0.0
  %1668 = vmatmul.mubr.f32.gmra.mrb[0].mxu0 %v1450
  %v1669 = vpop.f32.mrb[0].mxu0
  %v1670 = vadd.f32 %v59, %v1669
  %v1671 = vpop.f32.mrb[0].mxu0
  %1672 = vmatprep.mubr.f32.mxu0 0.0
  %1673 = vmatmul.mubr.f32.gmra.mrb[0].mxu0 %v1453
  %v1674 = vpop.f32.mrb[0].mxu0
  %v1675 = vadd.f32 %v59, %v1674
  %v1676 = vpop.f32.mrb[0].mxu0
  %1677 = vmatprep.mubr.f32.mxu0 0.0
  %1678 = vmatmul.mubr.f32.gmra.mrb[0].mxu0 %v1456
  %v1679 = vpop.f32.mrb[0].mxu0
  %v1680 = vadd.f32 %v59, %v1679
  %v1681 = vpop.f32.mrb[0].mxu0
  %1682 = vmatprep.mubr.f32.mxu0 0.0
  %1683 = vmatmul.mubr.f32.gmra.mrb[0].mxu0 %v1459
  %v1684 = vpop.f32.mrb[0].mxu0
  %v1685 = vadd.f32 %v59, %v1684
  %v1686 = vpop.f32.mrb[0].mxu0
  %1687 = vmatprep.mubr.f32.mxu0 0.0
  %1688 = vmatmul.mubr.f32.gmra.mrb[0].mxu0 %v1462
  %v1689 = vpop.f32.mrb[0].mxu0
  %v1690 = vadd.f32 %v59, %v1689
  %v1691 = vpop.f32.mrb[0].mxu0
  %1692 = vmatprep.mubr.f32.mxu0 0.0
  %1693 = vmatmul.mubr.f32.gmra.mrb[0].mxu0 %v1465
  %v1694 = vpop.f32.mrb[0].mxu0
  %v1695 = vadd.f32 %v59, %v1694
  %v1696 = vpop.f32.mrb[0].mxu0
  %1697 = vmatprep.mubr.f32.mxu0 0.0
  %1698 = vmatmul.mubr.f32.gmra.mrb[0].mxu0 %v1468
  %v1699 = vpop.f32.mrb[0].mxu0
  %v1700 = vadd.f32 %v59, %v1699
  %v1701 = vpop.f32.mrb[0].mxu0
  %1702 = vmatprep.mubr.f32.mxu0 0.0
  %1703 = vmatmul.mubr.f32.gmra.mrb[0].mxu0 %v1471
  %v1704 = vpop.f32.mrb[0].mxu0
  %v1705 = vadd.f32 %v59, %v1704
  %v1706 = vpop.f32.mrb[0].mxu0
  %1707 = vmatprep.mubr.f32.mxu0 0.0
  %1708 = vmatmul.mubr.f32.gmra.mrb[0].mxu0 %v1474
  %v1709 = vpop.f32.mrb[0].mxu0
  %v1710 = vadd.f32 %v59, %v1709
  %v1711 = vpop.f32.mrb[0].mxu0
  %1712 = vmatprep.mubr.f32.mxu0 0.0
  %1713 = vmatmul.mubr.f32.gmra.mrb[0].mxu0 %v1477
  %v1714 = vpop.f32.mrb[0].mxu0
  %v1715 = vadd.f32 %v59, %v1714
  %v1716 = vpop.f32.mrb[0].mxu0
  %1717 = vmatprep.mubr.f32.mxu0 0.0
  %1718 = vmatmul.mubr.f32.gmra.mrb[0].mxu0 %v1480
  %v1719 = vpop.f32.mrb[0].mxu0
  %v1720 = vadd.f32 %v59, %v1719
  %v1721 = vpop.f32.mrb[0].mxu0
  %1722 = vmatprep.mubr.f32.mxu0 0.0
  %1723 = vmatmul.mubr.f32.gmra.mrb[0].mxu0 %v1483
  %v1724 = vpop.f32.mrb[0].mxu0
  %v1725 = vadd.f32 %v59, %v1724
  %v1726 = vpop.f32.mrb[0].mxu0
  %1727 = vmatprep.mubr.f32.mxu0 0.0
  %1728 = vmatmul.mubr.f32.gmra.mrb[0].mxu0 %v1486
  %v1729 = vpop.f32.mrb[0].mxu0
  %v1730 = vadd.f32 %v59, %v1729
  %v1731 = vpop.f32.mrb[0].mxu0
  %1732 = vdwg.mxu0
  %v1733 = vmax.f32 %v1555, 0.0
  %v1734 = vmax.f32 %v1560, 0.0
  %v1735 = vmax.f32 %v1565, 0.0
  %v1736 = vmax.f32 %v1570, 0.0
  %v1737 = vmax.f32 %v1575, 0.0
  %v1738 = vmax.f32 %v1580, 0.0
  %v1739 = vmax.f32 %v1585, 0.0
  %v1740 = vmax.f32 %v1590, 0.0
  %v1741 = vmax.f32 %v1595, 0.0
  %v1742 = vmax.f32 %v1600, 0.0
  %v1743 = vmax.f32 %v1605, 0.0
  %v1744 = vmax.f32 %v1610, 0.0
  %v1745 = vmax.f32 %v1615, 0.0
  %v1746 = vmax.f32 %v1620, 0.0
  %v1747 = vmax.f32 %v1625, 0.0
  %v1748 = vmax.f32 %v1630, 0.0
  %v1749 = vmax.f32 %v1635, 0.0
  %v1750 = vmax.f32 %v1640, 0.0
  %v1751 = vmax.f32 %v1645, 0.0
  %v1752 = vmax.f32 %v1650, 0.0
  %v1753 = vmax.f32 %v1655, 0.0
  %v1754 = vmax.f32 %v1660, 0.0
  %v1755 = vmax.f32 %v1665, 0.0
  %v1756 = vmax.f32 %v1670, 0.0
  %v1757 = vmax.f32 %v1675, 0.0
  %v1758 = vmax.f32 %v1680, 0.0
  %v1759 = vmax.f32 %v1685, 0.0
  %v1760 = vmax.f32 %v1690, 0.0
  %v1761 = vmax.f32 %v1695, 0.0
  %v1762 = vmax.f32 %v1700, 0.0
  %v1763 = vmax.f32 %v1705, 0.0
  %v1764 = vmax.f32 %v1710, 0.0
  %v1765 = vmax.f32 %v1715, 0.0
  %v1766 = vmax.f32 %v1720, 0.0
  %v1767 = vmax.f32 %v1725, 0.0
  %v1768 = vmax.f32 %v1730, 0.0
  %v1769 = vmax.f32 %v1307, %v1733
  %v1770 = vmax.f32 %v1308, %v1734
  %v1771 = vmax.f32 %v1309, %v1735
  %v1772 = vmax.f32 %v1310, %v1736
  %v1773 = vmax.f32 %v1311, %v1737
  %v1774 = vmax.f32 %v1312, %v1738
  %v1775 = vmax.f32 %v1313, %v1739
  %v1776 = vmax.f32 %v1314, %v1740
  %v1777 = vmax.f32 %v1315, %v1741
  %v1778 = vmax.f32 %v1316, %v1742
  %v1779 = vmax.f32 %v1317, %v1743
  %v1780 = vmax.f32 %v1318, %v1744
  %v1781 = vmax.f32 %v1319, %v1745
  %v1782 = vmax.f32 %v1320, %v1746
  %v1783 = vmax.f32 %v1321, %v1747
  %v1784 = vmax.f32 %v1322, %v1748
  %v1785 = vmax.f32 %v1323, %v1749
  %v1786 = vmax.f32 %v1324, %v1750
  %v1787 = vmax.f32 %v1325, %v1751
  %v1788 = vmax.f32 %v1326, %v1752
  %v1789 = vmax.f32 %v1327, %v1753
  %v1790 = vmax.f32 %v1328, %v1754
  %v1791 = vmax.f32 %v1329, %v1755
  %v1792 = vmax.f32 %v1330, %v1756
  %v1793 = vmax.f32 %v1331, %v1757
  %v1794 = vmax.f32 %v1332, %v1758
  %v1795 = vmax.f32 %v1333, %v1759
  %v1796 = vmax.f32 %v1334, %v1760
  %v1797 = vmax.f32 %v1335, %v1761
  %v1798 = vmax.f32 %v1336, %v1762
  %v1799 = vmax.f32 %v1337, %v1763
  %v1800 = vmax.f32 %v1338, %v1764
  %v1801 = vmax.f32 %v1339, %v1765
  %v1802 = vmax.f32 %v1340, %v1766
  %v1803 = vmax.f32 %v1341, %v1767
  %v1804 = vmax.f32 %v1342, %v1768
  %v1805 = vmax.f32 %v881, %v1769
  %v1806 = vmax.f32 %v882, %v1770
  %v1807 = vmax.f32 %v883, %v1771
  %v1808 = vmax.f32 %v884, %v1772
  %v1809 = vmax.f32 %v885, %v1773
  %v1810 = vmax.f32 %v886, %v1774
  %v1811 = vmax.f32 %v887, %v1775
  %v1812 = vmax.f32 %v888, %v1776
  %v1813 = vmax.f32 %v889, %v1777
  %v1814 = vmax.f32 %v890, %v1778
  %v1815 = vmax.f32 %v891, %v1779
  %v1816 = vmax.f32 %v892, %v1780
  %v1817 = vmax.f32 %v893, %v1781
  %v1818 = vmax.f32 %v894, %v1782
  %v1819 = vmax.f32 %v895, %v1783
  %v1820 = vmax.f32 %v896, %v1784
  %v1821 = vmax.f32 %v897, %v1785
  %v1822 = vmax.f32 %v898, %v1786
  %v1823 = vmax.f32 %v899, %v1787
  %v1824 = vmax.f32 %v900, %v1788
  %v1825 = vmax.f32 %v901, %v1789
  %v1826 = vmax.f32 %v902, %v1790
  %v1827 = vmax.f32 %v903, %v1791
  %v1828 = vmax.f32 %v904, %v1792
  %v1829 = vmax.f32 %v905, %v1793
  %v1830 = vmax.f32 %v906, %v1794
  %v1831 = vmax.f32 %v907, %v1795
  %v1832 = vmax.f32 %v908, %v1796
  %v1833 = vmax.f32 %v909, %v1797
  %v1834 = vmax.f32 %v910, %v1798
  %v1835 = vmax.f32 %v911, %v1799
  %v1836 = vmax.f32 %v912, %v1800
  %v1837 = vmax.f32 %v913, %v1801
  %v1838 = vmax.f32 %v914, %v1802
  %v1839 = vmax.f32 %v915, %v1803
  %v1840 = vmax.f32 %v916, %v1804
  %1841 = vst [vmem:[%s3] sm:$0xff] %v1805
  %1842 = vst [vmem:[%s3 + $0x8] sm:$0xff] %v1806
  %1843 = vst [vmem:[%s3 + $0x10] sm:$0xff] %v1807
  %1844 = vst [vmem:[%s3 + $0x18] sm:$0xff] %v1808
  %1845 = vst [vmem:[%s3 + $0x20] sm:$0xff] %v1809
  %1846 = vst [vmem:[%s3 + $0x28] sm:$0xff] %v1810
  %1847 = vst [vmem:[%s3 + $0x30] sm:$0xff] %v1811
  %1848 = vst [vmem:[%s3 + $0x38] sm:$0xff] %v1812
  %1849 = vst [vmem:[%s3 + $0x40] sm:$0xff] %v1813
  %1850 = vst [vmem:[%s3 + $0x48] sm:$0xff] %v1814
  %1851 = vst [vmem:[%s3 + $0x50] sm:$0xff] %v1815
  %1852 = vst [vmem:[%s3 + $0x58] sm:$0xff] %v1816
  %1853 = vst [vmem:[%s3 + $0x60] sm:$0xff] %v1817
  %1854 = vst [vmem:[%s3 + $0x68] sm:$0xff] %v1818
  %1855 = vst [vmem:[%s3 + $0x70] sm:$0xff] %v1819
  %1856 = vst [vmem:[%s3 + $0x78] sm:$0xff] %v1820
  %1857 = vst [vmem:[%s3 + $0x80] sm:$0xff] %v1821
  %1858 = vst [vmem:[%s3 + $0x88] sm:$0xff] %v1822
  %1859 = vst [vmem:[%s3 + $0x90] sm:$0xff] %v1823
  %1860 = vst [vmem:[%s3 + $0x98] sm:$0xff] %v1824
  %1861 = vst [vmem:[%s3 + $0xa0] sm:$0xff] %v1825
  %1862 = vst [vmem:[%s3 + $0xa8] sm:$0xff] %v1826
  %1863 = vst [vmem:[%s3 + $0xb0] sm:$0xff] %v1827
  %1864 = vst [vmem:[%s3 + $0xb8] sm:$0xff] %v1828
  %1865 = vst [vmem:[%s3 + $0xc0] sm:$0xff] %v1829
  %1866 = vst [vmem:[%s3 + $0xc8] sm:$0xff] %v1830
  %1867 = vst [vmem:[%s3 + $0xd0] sm:$0xff] %v1831
  %1868 = vst [vmem:[%s3 + $0xd8] sm:$0xff] %v1832
  %1869 = vst [vmem:[%s3 + $0xe0] sm:$0xff] %v1833
  %1870 = vst [vmem:[%s3 + $0xe8] sm:$0xff] %v1834
  %1871 = vst [vmem:[%s3 + $0xf0] sm:$0xff] %v1835
  %1872 = vst [vmem:[%s3 + $0xf8] sm:$0xff] %v1836
  %1873 = vst [vmem:[%s3 + $0x100] sm:$0xff] %v1837
  %1874 = vst [vmem:[%s3 + $0x108] sm:$0xff] %v1838
  %1875 = vst [vmem:[%s3 + $0x110] sm:$0xff] %v1839
  %1876 = vst [vmem:[%s3 + $0x118] sm:$0xff] %v1840
  // Predicated region
  $region14: #{simple_cnn_forward.3} parent=0 // pred_check
    _
  $region15: #{simple_cnn_forward.3} parent=0 // pred_check_branch
    %1878 = sbr.rel (0) target = $region17
  $region16: #{simple_cnn_forward.3} parent=0 // pred_region
    _
  $region17: #{simple_cnn_forward.3} parent=0 // pred_fallthru
    _
  // Predicated region
  $region18: #{simple_cnn_forward.3} parent=0 // pred_check
    _
  $region19: #{simple_cnn_forward.3} parent=0 // pred_check_branch
    %1880 = sbr.rel (0) target = $region21
  $region20: #{simple_cnn_forward.3} parent=0 // pred_region
    _
  $region21: #{simple_cnn_forward.3} parent=0 // pred_fallthru
    _

// kernel: simple_cnn_forward.4
$region0: #{simple_cnn_forward.4}
  #allocation0 [shape = 'u32[]', space=smem, size = 0x4, offset = 0x4, fixed_abs, tag = 'smem constant byte address 0x4 - core index']
  #allocation1 [shape = 'u32[144,128]{1,0:T(1,128)}', space=vmem, size = 0x12000, scoped, tag = 'internal scratch']
  %s0 = inlined_call_operand.vmem [shape: f32[4,32,150], index: 0, kind: input, shape index: {}]
  %s1 = inlined_call_operand.vmem [shape: f32[150,128], index: 1, kind: input, shape index: {}]
  %s2 = inlined_call_operand.vmem [shape: f32[1,128], index: 2, kind: input, shape index: {}]
  %s3 = inlined_call_operand.vmem [shape: f32[32,128], index: 3, kind: output, shape index: {}]
  %s4 = sld [smem:[#allocation0]]
  $region22: #{simple_cnn_forward.4} parent=0
    _
  %s6 = ssub.s32 1, %s4
  %s7 = scalar_select 0, %s6, %s4
  // Predicated region
  $region2: #{simple_cnn_forward.4} parent=0 // pred_check
    _
  $region3: #{simple_cnn_forward.4} parent=0 // pred_check_branch
    %9 = sbr.rel (0) target = $region5
  $region4: #{simple_cnn_forward.4} parent=0 // pred_region
    _
  $region5: #{simple_cnn_forward.4} parent=0 // pred_fallthru
    _
  // Predicated region
  $region6: #{simple_cnn_forward.4} parent=0 // pred_check
    _
  $region7: #{simple_cnn_forward.4} parent=0 // pred_check_branch
    %11 = sbr.rel (0) target = $region9
  $region8: #{simple_cnn_forward.4} parent=0 // pred_region
    _
  $region9: #{simple_cnn_forward.4} parent=0 // pred_fallthru
    _
  // Predicated region
  $region10: #{simple_cnn_forward.4} parent=0 // pred_check
    _
  $region11: #{simple_cnn_forward.4} parent=0 // pred_check_branch
    %13 = sbr.rel (0) target = $region13
  $region12: #{simple_cnn_forward.4} parent=0 // pred_region
    _
  $region13: #{simple_cnn_forward.4} parent=0 // pred_fallthru
    _
  %v14 = vld [vmem:[%s1] sm:$0xff]
  %v15 = vld [vmem:[%s1 + $0x8] sm:$0xff]
  %v16 = vld [vmem:[%s1 + $0x10] sm:$0xff]
  %v17 = vld [vmem:[%s1 + $0x18] sm:$0xff]
  %v18 = vld [vmem:[%s1 + $0x20] sm:$0xff]
  %v19 = vld [vmem:[%s1 + $0x28] sm:$0xff]
  %v20 = vld [vmem:[%s1 + $0x30] sm:$0xff]
  %v21 = vld [vmem:[%s1 + $0x38] sm:$0xff]
  %v22 = vld [vmem:[%s1 + $0x40] sm:$0xff]
  %v23 = vld [vmem:[%s1 + $0x48] sm:$0xff]
  %v24 = vld [vmem:[%s1 + $0x50] sm:$0xff]
  %v25 = vld [vmem:[%s1 + $0x58] sm:$0xff]
  %v26 = vld [vmem:[%s1 + $0x60] sm:$0xff]
  %v27 = vld [vmem:[%s1 + $0x68] sm:$0xff]
  %v28 = vld [vmem:[%s1 + $0x70] sm:$0xff]
  %v29 = vld [vmem:[%s1 + $0x78] sm:$0xff]
  %v30 = vld [vmem:[%s1 + $0x80] sm:$0xff]
  %v31 = vld [vmem:[%s1 + $0x88] sm:$0xff]
  %v32 = vld [vmem:[%s1 + $0x90] sm:$0x3f]
  %v33 = vld [vmem:[%s2] sm:$0x1]
  %v34 = vld [vmem:[%s0] sm:$0xff]
  %v35 = vld [vmem:[%s0 + $0x8] sm:$0xff]
  %v36 = vld [vmem:[%s0 + $0x10] sm:$0xff]
  %v37 = vld [vmem:[%s0 + $0x18] sm:$0xff]
  %v38 = vld [vmem:[%s0 + $0x20] sm:$0xff]
  %v39 = vld [vmem:[%s0 + $0x28] sm:$0xff]
  %v40 = vld [vmem:[%s0 + $0x30] sm:$0xff]
  %v41 = vld [vmem:[%s0 + $0x38] sm:$0xff]
  %v43 = vlaneseq
  %v44 = vshrl.u32 %v43, 7
  %v45 = vsub.s32 0, %v44
  %v46 = vrot.slane %v33, %v45
  %vm48 = vcmask 179200
  %v50 = vsel %vm48, %v35, 0
  %v53 = vsel %vm48, %v37, 0
  %v56 = vsel %vm48, %v39, 0
  %v59 = vsel %vm48, %v41, 0
  %vm61 = vcmask 1045504
  %v63 = vsel %vm61, %v32, 0
  %65 = vmatprep.subr.mxu0 0.0
  %66 = vmatpush1.msra.mxu0 %v14
  %67 = vmatprep.subr.mxu0 0.0
  %68 = vmatpush1.msra.mxu0 %v15
  %69 = vmatprep.subr.mxu0 0.0
  %70 = vmatpush1.msra.mxu0 %v16
  %71 = vmatprep.subr.mxu0 0.0
  %72 = vmatpush1.msra.mxu0 %v17
  %73 = vmatprep.subr.mxu0 0.0
  %74 = vmatpush1.msra.mxu0 %v18
  %75 = vmatprep.subr.mxu0 0.0
  %76 = vmatpush1.msra.mxu0 %v19
  %77 = vmatprep.subr.mxu0 0.0
  %78 = vmatpush1.msra.mxu0 %v20
  %79 = vmatprep.subr.mxu0 0.0
  %80 = vmatpush1.msra.mxu0 %v21
  %81 = vmatprep.subr.mxu0 0.0
  %82 = vmatpush1.msra.mxu0 %v22
  %83 = vmatprep.subr.mxu0 0.0
  %84 = vmatpush1.msra.mxu0 %v23
  %85 = vmatprep.subr.mxu0 0.0
  %86 = vmatpush1.msra.mxu0 %v24
  %87 = vmatprep.subr.mxu0 0.0
  %88 = vmatpush1.msra.mxu0 %v25
  %89 = vmatprep.subr.mxu0 0.0
  %90 = vmatpush1.msra.mxu0 %v26
  %91 = vmatprep.subr.mxu0 0.0
  %92 = vmatpush1.msra.mxu0 %v27
  %93 = vmatprep.subr.mxu0 0.0
  %94 = vmatpush1.msra.mxu0 %v28
  %95 = vmatprep.subr.mxu0 0.0
  %96 = vmatpush1.msra.mxu0 %v29
  %97 = vmatprep.subr.mxu0 0.0
  %98 = vmatpush1.msra.mxu0 %v30
  %99 = vmatprep.subr.mxu0 0.0
  %100 = vmatpush1.msra.mxu0 %v31
  %101 = vmatprep.subr.mxu0 0.0
  %102 = vmatpush1.msra.mxu0 %v63
  %103 = vmatprep.subr.mxu0 0.0
  %104 = vmatpush1.msra.mxu0 0.0
  %105 = vmatprep.subr.mxu0 0.0
  %106 = vmatpush1.msra.mxu0 0.0
  %107 = vmatprep.subr.mxu0 0.0
  %108 = vmatpush1.msra.mxu0 0.0
  %109 = vmatprep.subr.mxu0 0.0
  %110 = vmatpush1.msra.mxu0 0.0
  %111 = vmatprep.subr.mxu0 0.0
  %112 = vmatpush1.msra.mxu0 0.0
  %113 = vmatprep.subr.mxu0 0.0
  %114 = vmatpush1.msra.mxu0 0.0
  %115 = vmatprep.subr.mxu0 0.0
  %116 = vmatpush1.msra.mxu0 0.0
  %117 = vmatprep.subr.mxu0 0.0
  %118 = vmatpush1.msra.mxu0 0.0
  %119 = vmatprep.subr.mxu0 0.0
  %120 = vmatpush1.msra.mxu0 0.0
  %121 = vmatprep.subr.mxu0 0.0
  %122 = vmatpush1.msra.mxu0 0.0
  %123 = vmatprep.subr.mxu0 0.0
  %124 = vmatpush1.msra.mxu0 0.0
  %125 = vmatprep.subr.mxu0 0.0
  %126 = vmatpush1.msra.mxu0 0.0
  %127 = vmatprep.subr.mxu0 0.0
  %128 = vmatpush1.msra.mxu0 0.0
  %129 = vmatprep.mubr.f32.mxu0 %v50
  %130 = vmatmul.mubr.f32.gmra.mrb[0].mxu0 %v34
  %v131 = vpop.f32.mrb[0].mxu0
  %v132 = vadd.f32 %v46, %v131
  %v133 = vpop.f32.mrb[0].mxu0
  %134 = vmatprep.mubr.f32.mxu0 %v53
  %135 = vmatmul.mubr.f32.gmra.mrb[0].mxu0 %v36
  %v136 = vpop.f32.mrb[0].mxu0
  %v137 = vadd.f32 %v46, %v136
  %v138 = vpop.f32.mrb[0].mxu0
  %139 = vmatprep.mubr.f32.mxu0 %v56
  %140 = vmatmul.mubr.f32.gmra.mrb[0].mxu0 %v38
  %v141 = vpop.f32.mrb[0].mxu0
  %v142 = vadd.f32 %v46, %v141
  %v143 = vpop.f32.mrb[0].mxu0
  %144 = vmatprep.mubr.f32.mxu0 %v59
  %145 = vmatmul.mubr.f32.gmra.mrb[0].mxu0 %v40
  %v146 = vpop.f32.mrb[0].mxu0
  %v147 = vadd.f32 %v46, %v146
  %v148 = vpop.f32.mrb[0].mxu0
  %149 = vdwg.mxu0
  %v150 = vmax.f32 %v132, 0.0
  %v151 = vmax.f32 %v137, 0.0
  %v152 = vmax.f32 %v142, 0.0
  %v153 = vmax.f32 %v147, 0.0
  %s154 = scalar_lea.vmem %s0, 64
  %v155 = vld [vmem:[%s154] sm:$0xff]
  %v156 = vld [vmem:[%s154 + $0x8] sm:$0xff]
  %v157 = vld [vmem:[%s154 + $0x10] sm:$0xff]
  %v158 = vld [vmem:[%s154 + $0x18] sm:$0xff]
  %v159 = vld [vmem:[%s154 + $0x20] sm:$0xff]
  %v160 = vld [vmem:[%s154 + $0x28] sm:$0xff]
  %v161 = vld [vmem:[%s154 + $0x30] sm:$0xff]
  %v162 = vld [vmem:[%s154 + $0x38] sm:$0xff]
  %v164 = vsel %vm48, %v156, 0
  %v167 = vsel %vm48, %v158, 0
  %v170 = vsel %vm48, %v160, 0
  %v173 = vsel %vm48, %v162, 0
  %175 = vmatprep.subr.mxu0 0.0
  %176 = vmatpush1.msra.mxu0 %v14
  %177 = vmatprep.subr.mxu0 0.0
  %178 = vmatpush1.msra.mxu0 %v15
  %179 = vmatprep.subr.mxu0 0.0
  %180 = vmatpush1.msra.mxu0 %v16
  %181 = vmatprep.subr.mxu0 0.0
  %182 = vmatpush1.msra.mxu0 %v17
  %183 = vmatprep.subr.mxu0 0.0
  %184 = vmatpush1.msra.mxu0 %v18
  %185 = vmatprep.subr.mxu0 0.0
  %186 = vmatpush1.msra.mxu0 %v19
  %187 = vmatprep.subr.mxu0 0.0
  %188 = vmatpush1.msra.mxu0 %v20
  %189 = vmatprep.subr.mxu0 0.0
  %190 = vmatpush1.msra.mxu0 %v21
  %191 = vmatprep.subr.mxu0 0.0
  %192 = vmatpush1.msra.mxu0 %v22
  %193 = vmatprep.subr.mxu0 0.0
  %194 = vmatpush1.msra.mxu0 %v23
  %195 = vmatprep.subr.mxu0 0.0
  %196 = vmatpush1.msra.mxu0 %v24
  %197 = vmatprep.subr.mxu0 0.0
  %198 = vmatpush1.msra.mxu0 %v25
  %199 = vmatprep.subr.mxu0 0.0
  %200 = vmatpush1.msra.mxu0 %v26
  %201 = vmatprep.subr.mxu0 0.0
  %202 = vmatpush1.msra.mxu0 %v27
  %203 = vmatprep.subr.mxu0 0.0
  %204 = vmatpush1.msra.mxu0 %v28
  %205 = vmatprep.subr.mxu0 0.0
  %206 = vmatpush1.msra.mxu0 %v29
  %207 = vmatprep.subr.mxu0 0.0
  %208 = vmatpush1.msra.mxu0 %v30
  %209 = vmatprep.subr.mxu0 0.0
  %210 = vmatpush1.msra.mxu0 %v31
  %211 = vmatprep.subr.mxu0 0.0
  %212 = vmatpush1.msra.mxu0 %v63
  %213 = vmatprep.subr.mxu0 0.0
  %214 = vmatpush1.msra.mxu0 0.0
  %215 = vmatprep.subr.mxu0 0.0
  %216 = vmatpush1.msra.mxu0 0.0
  %217 = vmatprep.subr.mxu0 0.0
  %218 = vmatpush1.msra.mxu0 0.0
  %219 = vmatprep.subr.mxu0 0.0
  %220 = vmatpush1.msra.mxu0 0.0
  %221 = vmatprep.subr.mxu0 0.0
  %222 = vmatpush1.msra.mxu0 0.0
  %223 = vmatprep.subr.mxu0 0.0
  %224 = vmatpush1.msra.mxu0 0.0
  %225 = vmatprep.subr.mxu0 0.0
  %226 = vmatpush1.msra.mxu0 0.0
  %227 = vmatprep.subr.mxu0 0.0
  %228 = vmatpush1.msra.mxu0 0.0
  %229 = vmatprep.subr.mxu0 0.0
  %230 = vmatpush1.msra.mxu0 0.0
  %231 = vmatprep.subr.mxu0 0.0
  %232 = vmatpush1.msra.mxu0 0.0
  %233 = vmatprep.subr.mxu0 0.0
  %234 = vmatpush1.msra.mxu0 0.0
  %235 = vmatprep.subr.mxu0 0.0
  %236 = vmatpush1.msra.mxu0 0.0
  %237 = vmatprep.subr.mxu0 0.0
  %238 = vmatpush1.msra.mxu0 0.0
  %239 = vmatprep.mubr.f32.mxu0 %v164
  %240 = vmatmul.mubr.f32.gmra.mrb[0].mxu0 %v155
  %v241 = vpop.f32.mrb[0].mxu0
  %v242 = vadd.f32 %v46, %v241
  %v243 = vpop.f32.mrb[0].mxu0
  %244 = vmatprep.mubr.f32.mxu0 %v167
  %245 = vmatmul.mubr.f32.gmra.mrb[0].mxu0 %v157
  %v246 = vpop.f32.mrb[0].mxu0
  %v247 = vadd.f32 %v46, %v246
  %v248 = vpop.f32.mrb[0].mxu0
  %249 = vmatprep.mubr.f32.mxu0 %v170
  %250 = vmatmul.mubr.f32.gmra.mrb[0].mxu0 %v159
  %v251 = vpop.f32.mrb[0].mxu0
  %v252 = vadd.f32 %v46, %v251
  %v253 = vpop.f32.mrb[0].mxu0
  %254 = vmatprep.mubr.f32.mxu0 %v173
  %255 = vmatmul.mubr.f32.gmra.mrb[0].mxu0 %v161
  %v256 = vpop.f32.mrb[0].mxu0
  %v257 = vadd.f32 %v46, %v256
  %v258 = vpop.f32.mrb[0].mxu0
  %259 = vdwg.mxu0
  %v260 = vmax.f32 %v242, 0.0
  %v261 = vmax.f32 %v247, 0.0
  %v262 = vmax.f32 %v252, 0.0
  %v263 = vmax.f32 %v257, 0.0
  %v264 = vmax.f32 %v150, %v260
  %v265 = vmax.f32 %v151, %v261
  %v266 = vmax.f32 %v152, %v262
  %v267 = vmax.f32 %v153, %v263
  %s268 = scalar_lea.vmem %s0, 128
  %v269 = vld [vmem:[%s268] sm:$0xff]
  %v270 = vld [vmem:[%s268 + $0x8] sm:$0xff]
  %v271 = vld [vmem:[%s268 + $0x10] sm:$0xff]
  %v272 = vld [vmem:[%s268 + $0x18] sm:$0xff]
  %v273 = vld [vmem:[%s268 + $0x20] sm:$0xff]
  %v274 = vld [vmem:[%s268 + $0x28] sm:$0xff]
  %v275 = vld [vmem:[%s268 + $0x30] sm:$0xff]
  %v276 = vld [vmem:[%s268 + $0x38] sm:$0xff]
  %v278 = vsel %vm48, %v270, 0
  %v281 = vsel %vm48, %v272, 0
  %v284 = vsel %vm48, %v274, 0
  %v287 = vsel %vm48, %v276, 0
  %289 = vmatprep.subr.mxu0 0.0
  %290 = vmatpush1.msra.mxu0 %v14
  %291 = vmatprep.subr.mxu0 0.0
  %292 = vmatpush1.msra.mxu0 %v15
  %293 = vmatprep.subr.mxu0 0.0
  %294 = vmatpush1.msra.mxu0 %v16
  %295 = vmatprep.subr.mxu0 0.0
  %296 = vmatpush1.msra.mxu0 %v17
  %297 = vmatprep.subr.mxu0 0.0
  %298 = vmatpush1.msra.mxu0 %v18
  %299 = vmatprep.subr.mxu0 0.0
  %300 = vmatpush1.msra.mxu0 %v19
  %301 = vmatprep.subr.mxu0 0.0
  %302 = vmatpush1.msra.mxu0 %v20
  %303 = vmatprep.subr.mxu0 0.0
  %304 = vmatpush1.msra.mxu0 %v21
  %305 = vmatprep.subr.mxu0 0.0
  %306 = vmatpush1.msra.mxu0 %v22
  %307 = vmatprep.subr.mxu0 0.0
  %308 = vmatpush1.msra.mxu0 %v23
  %309 = vmatprep.subr.mxu0 0.0
  %310 = vmatpush1.msra.mxu0 %v24
  %311 = vmatprep.subr.mxu0 0.0
  %312 = vmatpush1.msra.mxu0 %v25
  %313 = vmatprep.subr.mxu0 0.0
  %314 = vmatpush1.msra.mxu0 %v26
  %315 = vmatprep.subr.mxu0 0.0
  %316 = vmatpush1.msra.mxu0 %v27
  %317 = vmatprep.subr.mxu0 0.0
  %318 = vmatpush1.msra.mxu0 %v28
  %319 = vmatprep.subr.mxu0 0.0
  %320 = vmatpush1.msra.mxu0 %v29
  %321 = vmatprep.subr.mxu0 0.0
  %322 = vmatpush1.msra.mxu0 %v30
  %323 = vmatprep.subr.mxu0 0.0
  %324 = vmatpush1.msra.mxu0 %v31
  %325 = vmatprep.subr.mxu0 0.0
  %326 = vmatpush1.msra.mxu0 %v63
  %327 = vmatprep.subr.mxu0 0.0
  %328 = vmatpush1.msra.mxu0 0.0
  %329 = vmatprep.subr.mxu0 0.0
  %330 = vmatpush1.msra.mxu0 0.0
  %331 = vmatprep.subr.mxu0 0.0
  %332 = vmatpush1.msra.mxu0 0.0
  %333 = vmatprep.subr.mxu0 0.0
  %334 = vmatpush1.msra.mxu0 0.0
  %335 = vmatprep.subr.mxu0 0.0
  %336 = vmatpush1.msra.mxu0 0.0
  %337 = vmatprep.subr.mxu0 0.0
  %338 = vmatpush1.msra.mxu0 0.0
  %339 = vmatprep.subr.mxu0 0.0
  %340 = vmatpush1.msra.mxu0 0.0
  %341 = vmatprep.subr.mxu0 0.0
  %342 = vmatpush1.msra.mxu0 0.0
  %343 = vmatprep.subr.mxu0 0.0
  %344 = vmatpush1.msra.mxu0 0.0
  %345 = vmatprep.subr.mxu0 0.0
  %346 = vmatpush1.msra.mxu0 0.0
  %347 = vmatprep.subr.mxu0 0.0
  %348 = vmatpush1.msra.mxu0 0.0
  %349 = vmatprep.subr.mxu0 0.0
  %350 = vmatpush1.msra.mxu0 0.0
  %351 = vmatprep.subr.mxu0 0.0
  %352 = vmatpush1.msra.mxu0 0.0
  %353 = vmatprep.mubr.f32.mxu0 %v278
  %354 = vmatmul.mubr.f32.gmra.mrb[0].mxu0 %v269
  %v355 = vpop.f32.mrb[0].mxu0
  %v356 = vadd.f32 %v46, %v355
  %v357 = vpop.f32.mrb[0].mxu0
  %358 = vmatprep.mubr.f32.mxu0 %v281
  %359 = vmatmul.mubr.f32.gmra.mrb[0].mxu0 %v271
  %v360 = vpop.f32.mrb[0].mxu0
  %v361 = vadd.f32 %v46, %v360
  %v362 = vpop.f32.mrb[0].mxu0
  %363 = vmatprep.mubr.f32.mxu0 %v284
  %364 = vmatmul.mubr.f32.gmra.mrb[0].mxu0 %v273
  %v365 = vpop.f32.mrb[0].mxu0
  %v366 = vadd.f32 %v46, %v365
  %v367 = vpop.f32.mrb[0].mxu0
  %368 = vmatprep.mubr.f32.mxu0 %v287
  %369 = vmatmul.mubr.f32.gmra.mrb[0].mxu0 %v275
  %v370 = vpop.f32.mrb[0].mxu0
  %v371 = vadd.f32 %v46, %v370
  %v372 = vpop.f32.mrb[0].mxu0
  %373 = vdwg.mxu0
  %v374 = vmax.f32 %v356, 0.0
  %v375 = vmax.f32 %v361, 0.0
  %v376 = vmax.f32 %v366, 0.0
  %v377 = vmax.f32 %v371, 0.0
  %s378 = scalar_lea.vmem %s0, 192
  %v379 = vld [vmem:[%s378] sm:$0xff]
  %v380 = vld [vmem:[%s378 + $0x8] sm:$0xff]
  %v381 = vld [vmem:[%s378 + $0x10] sm:$0xff]
  %v382 = vld [vmem:[%s378 + $0x18] sm:$0xff]
  %v383 = vld [vmem:[%s378 + $0x20] sm:$0xff]
  %v384 = vld [vmem:[%s378 + $0x28] sm:$0xff]
  %v385 = vld [vmem:[%s378 + $0x30] sm:$0xff]
  %v386 = vld [vmem:[%s378 + $0x38] sm:$0xff]
  %v388 = vsel %vm48, %v380, 0
  %v391 = vsel %vm48, %v382, 0
  %v394 = vsel %vm48, %v384, 0
  %v397 = vsel %vm48, %v386, 0
  %399 = vmatprep.subr.mxu0 0.0
  %400 = vmatpush1.msra.mxu0 %v14
  %401 = vmatprep.subr.mxu0 0.0
  %402 = vmatpush1.msra.mxu0 %v15
  %403 = vmatprep.subr.mxu0 0.0
  %404 = vmatpush1.msra.mxu0 %v16
  %405 = vmatprep.subr.mxu0 0.0
  %406 = vmatpush1.msra.mxu0 %v17
  %407 = vmatprep.subr.mxu0 0.0
  %408 = vmatpush1.msra.mxu0 %v18
  %409 = vmatprep.subr.mxu0 0.0
  %410 = vmatpush1.msra.mxu0 %v19
  %411 = vmatprep.subr.mxu0 0.0
  %412 = vmatpush1.msra.mxu0 %v20
  %413 = vmatprep.subr.mxu0 0.0
  %414 = vmatpush1.msra.mxu0 %v21
  %415 = vmatprep.subr.mxu0 0.0
  %416 = vmatpush1.msra.mxu0 %v22
  %417 = vmatprep.subr.mxu0 0.0
  %418 = vmatpush1.msra.mxu0 %v23
  %419 = vmatprep.subr.mxu0 0.0
  %420 = vmatpush1.msra.mxu0 %v24
  %421 = vmatprep.subr.mxu0 0.0
  %422 = vmatpush1.msra.mxu0 %v25
  %423 = vmatprep.subr.mxu0 0.0
  %424 = vmatpush1.msra.mxu0 %v26
  %425 = vmatprep.subr.mxu0 0.0
  %426 = vmatpush1.msra.mxu0 %v27
  %427 = vmatprep.subr.mxu0 0.0
  %428 = vmatpush1.msra.mxu0 %v28
  %429 = vmatprep.subr.mxu0 0.0
  %430 = vmatpush1.msra.mxu0 %v29
  %431 = vmatprep.subr.mxu0 0.0
  %432 = vmatpush1.msra.mxu0 %v30
  %433 = vmatprep.subr.mxu0 0.0
  %434 = vmatpush1.msra.mxu0 %v31
  %435 = vmatprep.subr.mxu0 0.0
  %436 = vmatpush1.msra.mxu0 %v63
  %437 = vmatprep.subr.mxu0 0.0
  %438 = vmatpush1.msra.mxu0 0.0
  %439 = vmatprep.subr.mxu0 0.0
  %440 = vmatpush1.msra.mxu0 0.0
  %441 = vmatprep.subr.mxu0 0.0
  %442 = vmatpush1.msra.mxu0 0.0
  %443 = vmatprep.subr.mxu0 0.0
  %444 = vmatpush1.msra.mxu0 0.0
  %445 = vmatprep.subr.mxu0 0.0
  %446 = vmatpush1.msra.mxu0 0.0
  %447 = vmatprep.subr.mxu0 0.0
  %448 = vmatpush1.msra.mxu0 0.0
  %449 = vmatprep.subr.mxu0 0.0
  %450 = vmatpush1.msra.mxu0 0.0
  %451 = vmatprep.subr.mxu0 0.0
  %452 = vmatpush1.msra.mxu0 0.0
  %453 = vmatprep.subr.mxu0 0.0
  %454 = vmatpush1.msra.mxu0 0.0
  %455 = vmatprep.subr.mxu0 0.0
  %456 = vmatpush1.msra.mxu0 0.0
  %457 = vmatprep.subr.mxu0 0.0
  %458 = vmatpush1.msra.mxu0 0.0
  %459 = vmatprep.subr.mxu0 0.0
  %460 = vmatpush1.msra.mxu0 0.0
  %461 = vmatprep.subr.mxu0 0.0
  %462 = vmatpush1.msra.mxu0 0.0
  %463 = vmatprep.mubr.f32.mxu0 %v388
  %464 = vmatmul.mubr.f32.gmra.mrb[0].mxu0 %v379
  %v465 = vpop.f32.mrb[0].mxu0
  %v466 = vadd.f32 %v46, %v465
  %v467 = vpop.f32.mrb[0].mxu0
  %468 = vmatprep.mubr.f32.mxu0 %v391
  %469 = vmatmul.mubr.f32.gmra.mrb[0].mxu0 %v381
  %v470 = vpop.f32.mrb[0].mxu0
  %v471 = vadd.f32 %v46, %v470
  %v472 = vpop.f32.mrb[0].mxu0
  %473 = vmatprep.mubr.f32.mxu0 %v394
  %474 = vmatmul.mubr.f32.gmra.mrb[0].mxu0 %v383
  %v475 = vpop.f32.mrb[0].mxu0
  %v476 = vadd.f32 %v46, %v475
  %v477 = vpop.f32.mrb[0].mxu0
  %478 = vmatprep.mubr.f32.mxu0 %v397
  %479 = vmatmul.mubr.f32.gmra.mrb[0].mxu0 %v385
  %v480 = vpop.f32.mrb[0].mxu0
  %v481 = vadd.f32 %v46, %v480
  %v482 = vpop.f32.mrb[0].mxu0
  %483 = vdwg.mxu0
  %v484 = vmax.f32 %v466, 0.0
  %v485 = vmax.f32 %v471, 0.0
  %v486 = vmax.f32 %v476, 0.0
  %v487 = vmax.f32 %v481, 0.0
  %v488 = vmax.f32 %v374, %v484
  %v489 = vmax.f32 %v375, %v485
  %v490 = vmax.f32 %v376, %v486
  %v491 = vmax.f32 %v377, %v487
  %v492 = vmax.f32 %v264, %v488
  %v493 = vmax.f32 %v265, %v489
  %v494 = vmax.f32 %v266, %v490
  %v495 = vmax.f32 %v267, %v491
  %496 = vst [vmem:[%s3] sm:$0xff] %v492
  %497 = vst [vmem:[%s3 + $0x8] sm:$0xff] %v493
  %498 = vst [vmem:[%s3 + $0x10] sm:$0xff] %v494
  %499 = vst [vmem:[%s3 + $0x18] sm:$0xff] %v495
  // Predicated region
  $region14: #{simple_cnn_forward.4} parent=0 // pred_check
    _
  $region15: #{simple_cnn_forward.4} parent=0 // pred_check_branch
    %501 = sbr.rel (0) target = $region17
  $region16: #{simple_cnn_forward.4} parent=0 // pred_region
    _
  $region17: #{simple_cnn_forward.4} parent=0 // pred_fallthru
    _
  // Predicated region
  $region18: #{simple_cnn_forward.4} parent=0 // pred_check
    _
  $region19: #{simple_cnn_forward.4} parent=0 // pred_check_branch
    %503 = sbr.rel (0) target = $region21
  $region20: #{simple_cnn_forward.4} parent=0 // pred_region
    _
  $region21: #{simple_cnn_forward.4} parent=0 // pred_fallthru
    _

// kernel: simple_cnn_forward.5
$region0: #{simple_cnn_forward.5}
  #allocation0 [shape = 'u32[]', space=smem, size = 0x4, offset = 0x4, fixed_abs, tag = 'smem constant byte address 0x4 - core index']
  #allocation1 [shape = 'u32[144,128]{1,0:T(1,128)}', space=vmem, size = 0x12000, scoped, tag = 'internal scratch']
  %s0 = inlined_call_operand.vmem [shape: f32[8,256], index: 0, kind: input, shape index: {}]
  %s1 = inlined_call_operand.vmem [shape: f32[256,128], index: 1, kind: input, shape index: {}]
  %s2 = inlined_call_operand.vmem [shape: f32[1,128], index: 2, kind: input, shape index: {}]
  %s3 = inlined_call_operand.vmem [shape: f32[128,128], index: 3, kind: input, shape index: {}]
  %s4 = inlined_call_operand.vmem [shape: f32[1,128], index: 4, kind: input, shape index: {}]
  %s5 = inlined_call_operand.vmem [shape: f32[128,128], index: 5, kind: input, shape index: {}]
  %s6 = inlined_call_operand.vmem [shape: f32[1,128], index: 6, kind: input, shape index: {}]
  %s7 = inlined_call_operand.vmem [shape: f32[8,128], index: 7, kind: output, shape index: {}]
  %s8 = sld [smem:[#allocation0]]
  $region38: #{simple_cnn_forward.5} parent=0
    _
  %s10 = ssub.s32 1, %s8
  %s11 = scalar_select 0, %s10, %s8
  // Predicated region
  $region2: #{simple_cnn_forward.5} parent=0 // pred_check
    _
  $region3: #{simple_cnn_forward.5} parent=0 // pred_check_branch
    %13 = sbr.rel (0) target = $region5
  $region4: #{simple_cnn_forward.5} parent=0 // pred_region
    _
  $region5: #{simple_cnn_forward.5} parent=0 // pred_fallthru
    _
  // Predicated region
  $region6: #{simple_cnn_forward.5} parent=0 // pred_check
    _
  $region7: #{simple_cnn_forward.5} parent=0 // pred_check_branch
    %15 = sbr.rel (0) target = $region9
  $region8: #{simple_cnn_forward.5} parent=0 // pred_region
    _
  $region9: #{simple_cnn_forward.5} parent=0 // pred_fallthru
    _
  // Predicated region
  $region10: #{simple_cnn_forward.5} parent=0 // pred_check
    _
  $region11: #{simple_cnn_forward.5} parent=0 // pred_check_branch
    %17 = sbr.rel (0) target = $region13
  $region12: #{simple_cnn_forward.5} parent=0 // pred_region
    _
  $region13: #{simple_cnn_forward.5} parent=0 // pred_fallthru
    _
  // Predicated region
  $region14: #{simple_cnn_forward.5} parent=0 // pred_check
    _
  $region15: #{simple_cnn_forward.5} parent=0 // pred_check_branch
    %19 = sbr.rel (0) target = $region17
  $region16: #{simple_cnn_forward.5} parent=0 // pred_region
    _
  $region17: #{simple_cnn_forward.5} parent=0 // pred_fallthru
    _
  // Predicated region
  $region18: #{simple_cnn_forward.5} parent=0 // pred_check
    _
  $region19: #{simple_cnn_forward.5} parent=0 // pred_check_branch
    %21 = sbr.rel (0) target = $region21
  $region20: #{simple_cnn_forward.5} parent=0 // pred_region
    _
  $region21: #{simple_cnn_forward.5} parent=0 // pred_fallthru
    _
  // Predicated region
  $region22: #{simple_cnn_forward.5} parent=0 // pred_check
    _
  $region23: #{simple_cnn_forward.5} parent=0 // pred_check_branch
    %23 = sbr.rel (0) target = $region25
  $region24: #{simple_cnn_forward.5} parent=0 // pred_region
    _
  $region25: #{simple_cnn_forward.5} parent=0 // pred_fallthru
    _
  // Predicated region
  $region26: #{simple_cnn_forward.5} parent=0 // pred_check
    _
  $region27: #{simple_cnn_forward.5} parent=0 // pred_check_branch
    %25 = sbr.rel (0) target = $region29
  $region28: #{simple_cnn_forward.5} parent=0 // pred_region
    _
  $region29: #{simple_cnn_forward.5} parent=0 // pred_fallthru
    _
  %v26 = vld [vmem:[%s0] sm:$0xff]
  %v27 = vld [vmem:[%s0 + $0x8] sm:$0xff]
  %v28 = vld [vmem:[%s1] sm:$0xff]
  %v29 = vld [vmem:[%s1 + $0x8] sm:$0xff]
  %v30 = vld [vmem:[%s1 + $0x10] sm:$0xff]
  %v31 = vld [vmem:[%s1 + $0x18] sm:$0xff]
  %v32 = vld [vmem:[%s1 + $0x20] sm:$0xff]
  %v33 = vld [vmem:[%s1 + $0x28] sm:$0xff]
  %v34 = vld [vmem:[%s1 + $0x30] sm:$0xff]
  %v35 = vld [vmem:[%s1 + $0x38] sm:$0xff]
  %v36 = vld [vmem:[%s1 + $0x40] sm:$0xff]
  %v37 = vld [vmem:[%s1 + $0x48] sm:$0xff]
  %v38 = vld [vmem:[%s1 + $0x50] sm:$0xff]
  %v39 = vld [vmem:[%s1 + $0x58] sm:$0xff]
  %v40 = vld [vmem:[%s1 + $0x60] sm:$0xff]
  %v41 = vld [vmem:[%s1 + $0x68] sm:$0xff]
  %v42 = vld [vmem:[%s1 + $0x70] sm:$0xff]
  %v43 = vld [vmem:[%s1 + $0x78] sm:$0xff]
  %v44 = vld [vmem:[%s1 + $0x80] sm:$0xff]
  %v45 = vld [vmem:[%s1 + $0x88] sm:$0xff]
  %v46 = vld [vmem:[%s1 + $0x90] sm:$0xff]
  %v47 = vld [vmem:[%s1 + $0x98] sm:$0xff]
  %v48 = vld [vmem:[%s1 + $0xa0] sm:$0xff]
  %v49 = vld [vmem:[%s1 + $0xa8] sm:$0xff]
  %v50 = vld [vmem:[%s1 + $0xb0] sm:$0xff]
  %v51 = vld [vmem:[%s1 + $0xb8] sm:$0xff]
  %v52 = vld [vmem:[%s1 + $0xc0] sm:$0xff]
  %v53 = vld [vmem:[%s1 + $0xc8] sm:$0xff]
  %v54 = vld [vmem:[%s1 + $0xd0] sm:$0xff]
  %v55 = vld [vmem:[%s1 + $0xd8] sm:$0xff]
  %v56 = vld [vmem:[%s1 + $0xe0] sm:$0xff]
  %v57 = vld [vmem:[%s1 + $0xe8] sm:$0xff]
  %v58 = vld [vmem:[%s1 + $0xf0] sm:$0xff]
  %v59 = vld [vmem:[%s1 + $0xf8] sm:$0xff]
  %v60 = vld [vmem:[%s2] sm:$0x1]
  %v62 = vlaneseq
  %v63 = vshrl.u32 %v62, 7
  %v64 = vsub.s32 0, %v63
  %v65 = vrot.slane %v60, %v64
  %67 = vmatprep.subr.mxu0 0.0
  %68 = vmatpush1.msra.mxu0 %v28
  %69 = vmatprep.subr.mxu0 0.0
  %70 = vmatpush1.msra.mxu0 %v29
  %71 = vmatprep.subr.mxu0 0.0
  %72 = vmatpush1.msra.mxu0 %v30
  %73 = vmatprep.subr.mxu0 0.0
  %74 = vmatpush1.msra.mxu0 %v31
  %75 = vmatprep.subr.mxu0 0.0
  %76 = vmatpush1.msra.mxu0 %v32
  %77 = vmatprep.subr.mxu0 0.0
  %78 = vmatpush1.msra.mxu0 %v33
  %79 = vmatprep.subr.mxu0 0.0
  %80 = vmatpush1.msra.mxu0 %v34
  %81 = vmatprep.subr.mxu0 0.0
  %82 = vmatpush1.msra.mxu0 %v35
  %83 = vmatprep.subr.mxu0 0.0
  %84 = vmatpush1.msra.mxu0 %v36
  %85 = vmatprep.subr.mxu0 0.0
  %86 = vmatpush1.msra.mxu0 %v37
  %87 = vmatprep.subr.mxu0 0.0
  %88 = vmatpush1.msra.mxu0 %v38
  %89 = vmatprep.subr.mxu0 0.0
  %90 = vmatpush1.msra.mxu0 %v39
  %91 = vmatprep.subr.mxu0 0.0
  %92 = vmatpush1.msra.mxu0 %v40
  %93 = vmatprep.subr.mxu0 0.0
  %94 = vmatpush1.msra.mxu0 %v41
  %95 = vmatprep.subr.mxu0 0.0
  %96 = vmatpush1.msra.mxu0 %v42
  %97 = vmatprep.subr.mxu0 0.0
  %98 = vmatpush1.msra.mxu0 %v43
  %99 = vmatprep.subr.mxu0 0.0
  %100 = vmatpush1.msra.mxu0 %v44
  %101 = vmatprep.subr.mxu0 0.0
  %102 = vmatpush1.msra.mxu0 %v45
  %103 = vmatprep.subr.mxu0 0.0
  %104 = vmatpush1.msra.mxu0 %v46
  %105 = vmatprep.subr.mxu0 0.0
  %106 = vmatpush1.msra.mxu0 %v47
  %107 = vmatprep.subr.mxu0 0.0
  %108 = vmatpush1.msra.mxu0 %v48
  %109 = vmatprep.subr.mxu0 0.0
  %110 = vmatpush1.msra.mxu0 %v49
  %111 = vmatprep.subr.mxu0 0.0
  %112 = vmatpush1.msra.mxu0 %v50
  %113 = vmatprep.subr.mxu0 0.0
  %114 = vmatpush1.msra.mxu0 %v51
  %115 = vmatprep.subr.mxu0 0.0
  %116 = vmatpush1.msra.mxu0 %v52
  %117 = vmatprep.subr.mxu0 0.0
  %118 = vmatpush1.msra.mxu0 %v53
  %119 = vmatprep.subr.mxu0 0.0
  %120 = vmatpush1.msra.mxu0 %v54
  %121 = vmatprep.subr.mxu0 0.0
  %122 = vmatpush1.msra.mxu0 %v55
  %123 = vmatprep.subr.mxu0 0.0
  %124 = vmatpush1.msra.mxu0 %v56
  %125 = vmatprep.subr.mxu0 0.0
  %126 = vmatpush1.msra.mxu0 %v57
  %127 = vmatprep.subr.mxu0 0.0
  %128 = vmatpush1.msra.mxu0 %v58
  %129 = vmatprep.subr.mxu0 0.0
  %130 = vmatpush1.msra.mxu0 %v59
  %131 = vmatprep.mubr.f32.mxu0 %v27
  %132 = vmatmul.mubr.f32.gmra.mrb[0].mxu0 %v26
  %v133 = vpop.f32.mrb[0].mxu0
  %v134 = vadd.f32 %v65, %v133
  %v135 = vpop.f32.mrb[0].mxu0
  %136 = vdwg.mxu0
  %v137 = vmax.f32 %v134, 0.0
  %v138 = vld [vmem:[%s3] sm:$0xff]
  %v139 = vld [vmem:[%s3 + $0x8] sm:$0xff]
  %v140 = vld [vmem:[%s3 + $0x10] sm:$0xff]
  %v141 = vld [vmem:[%s3 + $0x18] sm:$0xff]
  %v142 = vld [vmem:[%s3 + $0x20] sm:$0xff]
  %v143 = vld [vmem:[%s3 + $0x28] sm:$0xff]
  %v144 = vld [vmem:[%s3 + $0x30] sm:$0xff]
  %v145 = vld [vmem:[%s3 + $0x38] sm:$0xff]
  %v146 = vld [vmem:[%s3 + $0x40] sm:$0xff]
  %v147 = vld [vmem:[%s3 + $0x48] sm:$0xff]
  %v148 = vld [vmem:[%s3 + $0x50] sm:$0xff]
  %v149 = vld [vmem:[%s3 + $0x58] sm:$0xff]
  %v150 = vld [vmem:[%s3 + $0x60] sm:$0xff]
  %v151 = vld [vmem:[%s3 + $0x68] sm:$0xff]
  %v152 = vld [vmem:[%s3 + $0x70] sm:$0xff]
  %v153 = vld [vmem:[%s3 + $0x78] sm:$0xff]
  %v154 = vld [vmem:[%s4] sm:$0x1]
  %v156 = vlaneseq
  %v157 = vshrl.u32 %v156, 7
  %v158 = vsub.s32 0, %v157
  %v159 = vrot.slane %v154, %v158
  %161 = vmatprep.subr.mxu0 0.0
  %162 = vmatpush1.msra.mxu0 %v138
  %163 = vmatprep.subr.mxu0 0.0
  %164 = vmatpush1.msra.mxu0 %v139
  %165 = vmatprep.subr.mxu0 0.0
  %166 = vmatpush1.msra.mxu0 %v140
  %167 = vmatprep.subr.mxu0 0.0
  %168 = vmatpush1.msra.mxu0 %v141
  %169 = vmatprep.subr.mxu0 0.0
  %170 = vmatpush1.msra.mxu0 %v142
  %171 = vmatprep.subr.mxu0 0.0
  %172 = vmatpush1.msra.mxu0 %v143
  %173 = vmatprep.subr.mxu0 0.0
  %174 = vmatpush1.msra.mxu0 %v144
  %175 = vmatprep.subr.mxu0 0.0
  %176 = vmatpush1.msra.mxu0 %v145
  %177 = vmatprep.subr.mxu0 0.0
  %178 = vmatpush1.msra.mxu0 %v146
  %179 = vmatprep.subr.mxu0 0.0
  %180 = vmatpush1.msra.mxu0 %v147
  %181 = vmatprep.subr.mxu0 0.0
  %182 = vmatpush1.msra.mxu0 %v148
  %183 = vmatprep.subr.mxu0 0.0
  %184 = vmatpush1.msra.mxu0 %v149
  %185 = vmatprep.subr.mxu0 0.0
  %186 = vmatpush1.msra.mxu0 %v150
  %187 = vmatprep.subr.mxu0 0.0
  %188 = vmatpush1.msra.mxu0 %v151
  %189 = vmatprep.subr.mxu0 0.0
  %190 = vmatpush1.msra.mxu0 %v152
  %191 = vmatprep.subr.mxu0 0.0
  %192 = vmatpush1.msra.mxu0 %v153
  %193 = vmatprep.subr.mxu0 0.0
  %194 = vmatpush1.msra.mxu0 0.0
  %195 = vmatprep.subr.mxu0 0.0
  %196 = vmatpush1.msra.mxu0 0.0
  %197 = vmatprep.subr.mxu0 0.0
  %198 = vmatpush1.msra.mxu0 0.0
  %199 = vmatprep.subr.mxu0 0.0
  %200 = vmatpush1.msra.mxu0 0.0
  %201 = vmatprep.subr.mxu0 0.0
  %202 = vmatpush1.msra.mxu0 0.0
  %203 = vmatprep.subr.mxu0 0.0
  %204 = vmatpush1.msra.mxu0 0.0
  %205 = vmatprep.subr.mxu0 0.0
  %206 = vmatpush1.msra.mxu0 0.0
  %207 = vmatprep.subr.mxu0 0.0
  %208 = vmatpush1.msra.mxu0 0.0
  %209 = vmatprep.subr.mxu0 0.0
  %210 = vmatpush1.msra.mxu0 0.0
  %211 = vmatprep.subr.mxu0 0.0
  %212 = vmatpush1.msra.mxu0 0.0
  %213 = vmatprep.subr.mxu0 0.0
  %214 = vmatpush1.msra.mxu0 0.0
  %215 = vmatprep.subr.mxu0 0.0
  %216 = vmatpush1.msra.mxu0 0.0
  %217 = vmatprep.subr.mxu0 0.0
  %218 = vmatpush1.msra.mxu0 0.0
  %219 = vmatprep.subr.mxu0 0.0
  %220 = vmatpush1.msra.mxu0 0.0
  %221 = vmatprep.subr.mxu0 0.0
  %222 = vmatpush1.msra.mxu0 0.0
  %223 = vmatprep.subr.mxu0 0.0
  %224 = vmatpush1.msra.mxu0 0.0
  %225 = vmatprep.mubr.f32.mxu0 0.0
  %226 = vmatmul.mubr.f32.gmra.mrb[0].mxu0 %v137
  %v227 = vpop.f32.mrb[0].mxu0
  %v228 = vadd.f32 %v159, %v227
  %v229 = vpop.f32.mrb[0].mxu0
  %230 = vdwg.mxu0
  %v231 = vmax.f32 %v228, 0.0
  %v232 = vld [vmem:[%s5] sm:$0xff]
  %v233 = vld [vmem:[%s5 + $0x8] sm:$0xff]
  %v234 = vld [vmem:[%s5 + $0x10] sm:$0xff]
  %v235 = vld [vmem:[%s5 + $0x18] sm:$0xff]
  %v236 = vld [vmem:[%s5 + $0x20] sm:$0xff]
  %v237 = vld [vmem:[%s5 + $0x28] sm:$0xff]
  %v238 = vld [vmem:[%s5 + $0x30] sm:$0xff]
  %v239 = vld [vmem:[%s5 + $0x38] sm:$0xff]
  %v240 = vld [vmem:[%s5 + $0x40] sm:$0xff]
  %v241 = vld [vmem:[%s5 + $0x48] sm:$0xff]
  %v242 = vld [vmem:[%s5 + $0x50] sm:$0xff]
  %v243 = vld [vmem:[%s5 + $0x58] sm:$0xff]
  %v244 = vld [vmem:[%s5 + $0x60] sm:$0xff]
  %v245 = vld [vmem:[%s5 + $0x68] sm:$0xff]
  %v246 = vld [vmem:[%s5 + $0x70] sm:$0xff]
  %v247 = vld [vmem:[%s5 + $0x78] sm:$0xff]
  %v248 = vld [vmem:[%s6] sm:$0x1]
  %v250 = vlaneseq
  %v251 = vshrl.u32 %v250, 7
  %v252 = vsub.s32 0, %v251
  %v253 = vrot.slane %v248, %v252
  %255 = vmatprep.subr.mxu0 0.0
  %256 = vmatpush1.msra.mxu0 %v232
  %257 = vmatprep.subr.mxu0 0.0
  %258 = vmatpush1.msra.mxu0 %v233
  %259 = vmatprep.subr.mxu0 0.0
  %260 = vmatpush1.msra.mxu0 %v234
  %261 = vmatprep.subr.mxu0 0.0
  %262 = vmatpush1.msra.mxu0 %v235
  %263 = vmatprep.subr.mxu0 0.0
  %264 = vmatpush1.msra.mxu0 %v236
  %265 = vmatprep.subr.mxu0 0.0
  %266 = vmatpush1.msra.mxu0 %v237
  %267 = vmatprep.subr.mxu0 0.0
  %268 = vmatpush1.msra.mxu0 %v238
  %269 = vmatprep.subr.mxu0 0.0
  %270 = vmatpush1.msra.mxu0 %v239
  %271 = vmatprep.subr.mxu0 0.0
  %272 = vmatpush1.msra.mxu0 %v240
  %273 = vmatprep.subr.mxu0 0.0
  %274 = vmatpush1.msra.mxu0 %v241
  %275 = vmatprep.subr.mxu0 0.0
  %276 = vmatpush1.msra.mxu0 %v242
  %277 = vmatprep.subr.mxu0 0.0
  %278 = vmatpush1.msra.mxu0 %v243
  %279 = vmatprep.subr.mxu0 0.0
  %280 = vmatpush1.msra.mxu0 %v244
  %281 = vmatprep.subr.mxu0 0.0
  %282 = vmatpush1.msra.mxu0 %v245
  %283 = vmatprep.subr.mxu0 0.0
  %284 = vmatpush1.msra.mxu0 %v246
  %285 = vmatprep.subr.mxu0 0.0
  %286 = vmatpush1.msra.mxu0 %v247
  %287 = vmatprep.subr.mxu0 0.0
  %288 = vmatpush1.msra.mxu0 0.0
  %289 = vmatprep.subr.mxu0 0.0
  %290 = vmatpush1.msra.mxu0 0.0
  %291 = vmatprep.subr.mxu0 0.0
  %292 = vmatpush1.msra.mxu0 0.0
  %293 = vmatprep.subr.mxu0 0.0
  %294 = vmatpush1.msra.mxu0 0.0
  %295 = vmatprep.subr.mxu0 0.0
  %296 = vmatpush1.msra.mxu0 0.0
  %297 = vmatprep.subr.mxu0 0.0
  %298 = vmatpush1.msra.mxu0 0.0
  %299 = vmatprep.subr.mxu0 0.0
  %300 = vmatpush1.msra.mxu0 0.0
  %301 = vmatprep.subr.mxu0 0.0
  %302 = vmatpush1.msra.mxu0 0.0
  %303 = vmatprep.subr.mxu0 0.0
  %304 = vmatpush1.msra.mxu0 0.0
  %305 = vmatprep.subr.mxu0 0.0
  %306 = vmatpush1.msra.mxu0 0.0
  %307 = vmatprep.subr.mxu0 0.0
  %308 = vmatpush1.msra.mxu0 0.0
  %309 = vmatprep.subr.mxu0 0.0
  %310 = vmatpush1.msra.mxu0 0.0
  %311 = vmatprep.subr.mxu0 0.0
  %312 = vmatpush1.msra.mxu0 0.0
  %313 = vmatprep.subr.mxu0 0.0
  %314 = vmatpush1.msra.mxu0 0.0
  %315 = vmatprep.subr.mxu0 0.0
  %316 = vmatpush1.msra.mxu0 0.0
  %317 = vmatprep.subr.mxu0 0.0
  %318 = vmatpush1.msra.mxu0 0.0
  %319 = vmatprep.mubr.f32.mxu0 0.0
  %320 = vmatmul.mubr.f32.gmra.mrb[0].mxu0 %v231
  %v321 = vpop.f32.mrb[0].mxu0
  %v322 = vadd.f32 %v253, %v321
  %v323 = vpop.f32.mrb[0].mxu0
  %324 = vdwg.mxu0
  %325 = vst [vmem:[%s7] sm:$0xff] %v322
  // Predicated region
  $region30: #{simple_cnn_forward.5} parent=0 // pred_check
    _
  $region31: #{simple_cnn_forward.5} parent=0 // pred_check_branch
    %327 = sbr.rel (0) target = $region33
  $region32: #{simple_cnn_forward.5} parent=0 // pred_region
    _
  $region33: #{simple_cnn_forward.5} parent=0 // pred_fallthru
    _
  // Predicated region
  $region34: #{simple_cnn_forward.5} parent=0 // pred_check
    _
  $region35: #{simple_cnn_forward.5} parent=0 // pred_check_branch
    %329 = sbr.rel (0) target = $region37
  $region36: #{simple_cnn_forward.5} parent=0 // pred_region
    _
  $region37: #{simple_cnn_forward.5} parent=0 // pred_fallthru
    _

</llo_original>
